<compile_context>
chip_gen: v6e
topology: v6e:2x2x1
jax: 0.10.0
libtpu: 0.0.40
codegen_flags: <defaults>
</compile_context>

<pallas_src>
import jax
import jax.numpy as jnp
from jax.experimental import pallas as pl
from jax.experimental.pallas import tpu as pltpu


_LANE = 128      # vreg lane width
_SUBLANE = 8     # vreg sublane depth


def _round_up(x, m):
    return (x + m - 1) // m * m


# ----------------------------- fused Pallas kernel -----------------------------

def _fused_gcn_kernel(a_ref, p_ref, x_ref, w1_ref, b1_ref, w2_ref, b2_ref,
                      o_ref, xw1_s, xw2_s, pa_s):
    """Per node-row stripe i of A_hat (grid axis, sequential):

        step 0 :  XW1  = X @ W1                    (kept resident in VMEM scratch)
        every i:  h1_i = relu(A_i @ XW1 + b1)      (conv1 + ReLU, dropout=identity)
                  XW2[i] = h1_i @ W2               (conv2 feature transform)
                  PA    += P[:, i] @ A_i           (pool folded into conv2 agg.)
        last   :  out   = PA @ XW2 + b2            (conv2 aggregation + mean pool)
    """
    i = pl.program_id(0)
    tile = a_ref.shape[0]

    @pl.when(i == 0)
    def _init():
        xw1_s[...] = jnp.dot(x_ref[...], w1_ref[...],
                             preferred_element_type=jnp.float32).astype(jnp.bfloat16)
        pa_s[...] = jnp.zeros_like(pa_s)

    a = a_ref[...]                                               # (T, Np) bf16

    # conv1 for this stripe: h1_i = relu(A_i @ XW1 + b1)  (f32 epilogue on VPU)
    h1 = jnp.dot(a, xw1_s[...], preferred_element_type=jnp.float32)
    h1 = jnp.maximum(h1 + b1_ref[...], 0.0)
    # dropout(p=0.5) in eval mode -> identity

    # conv2 feature transform for this stripe, stashed for the final aggregation.
    start = pl.multiple_of(i * tile, tile)
    xw2_s[pl.ds(start, tile), :] = jnp.dot(
        h1.astype(jnp.bfloat16), w2_ref[...],
        preferred_element_type=jnp.float32).astype(jnp.bfloat16)

    # Pooled adjacency: PA += P[:, stripe] @ A_stripe (reuses the streamed A tile,
    # so A_hat is read from HBM exactly once for both layers).
    pa_s[...] += jnp.dot(p_ref[...], a, preferred_element_type=jnp.float32)

    @pl.when(i == pl.num_programs(0) - 1)
    def _finalize():
        out = jnp.dot(pa_s[...].astype(jnp.bfloat16), xw2_s[...],
                      preferred_element_type=jnp.float32) + b2_ref[...]
        o_ref[...] = out.astype(o_ref.dtype)


# ------------------------------- host-side glue -------------------------------

def _pad2(a, rows, cols, dtype):
    out = jnp.zeros((rows, cols), dtype)
    return out.at[: a.shape[0], : a.shape[1]].set(a.astype(dtype))


def _choose_tile(n_pad128):
    # Largest node-row stripe whose double-buffered bf16 copy stays <= ~8 MiB
    # (ample headroom within v7x's 64 MiB VMEM); 512/256 preferred for the
    # 256x256 MXU on v6e/v7x, 128 is the floor.
    for tile in (512, 256, 128):
        if tile <= n_pad128 and 2 * tile * n_pad128 * 2 <= 8 * (1 << 20):
            return tile
    return 128


def gcn_fused_forward(a_hat_p, pool_p, x, w1, b1, w2, b2, *, tile):
    """a_hat_p: (Np, Np) bf16 padded normalized adjacency (zero padding rows/cols).
       pool_p : (Gp, Np) bf16 padded mean-pool matrix   (zero padding rows/cols).
    """
    n_p = a_hat_p.shape[0]
    g_p = pool_p.shape[0]
    cin, hid = w1.shape
    cout = w2.shape[1]

    cin_p = _round_up(cin, _LANE)
    hid_p = _round_up(hid, _LANE)
    cout_p = _round_up(cout, _LANE)

    x_p = _pad2(x, n_p, cin_p, jnp.bfloat16)
    w1_p = _pad2(w1, cin_p, hid_p, jnp.bfloat16)
    w2_p = _pad2(w2, hid_p, cout_p, jnp.bfloat16)
    b1_p = _pad2(b1.reshape(1, -1), 1, hid_p, jnp.float32)
    b2_p = _pad2(b2.reshape(1, -1), 1, cout_p, jnp.float32)

    n_steps = n_p // tile

    # VMEM budget derived from the actual padded working set (x2 for the
    # double-buffered pipelined inputs), clamped to 48 MiB so the same limit is
    # valid on v7x (64 MiB/TC) as well as v5e/v6e (128 MiB).
    bf2, f4 = 2, 4
    working = (
        2 * (tile * n_p + g_p * tile) * bf2                          # streamed A / P stripes
        + 2 * (n_p * cin_p + cin_p * hid_p + hid_p * cout_p) * bf2   # resident X, W1, W2
        + 2 * _SUBLANE * (hid_p + cout_p) * f4                       # biases (sublane-padded)
        + 2 * g_p * cout_p * f4                                      # output tile
        + (n_p * hid_p + n_p * cout_p) * bf2 + g_p * n_p * f4        # scratch: XW1, XW2, PA
    )
    vmem_limit = int(min(max(working * 5 // 4 + (2 << 20), 16 << 20), 48 << 20))

    grid_spec = pltpu.PrefetchScalarGridSpec(
        num_scalar_prefetch=0,
        grid=(n_steps,),
        in_specs=[
            pl.BlockSpec((tile, n_p), lambda i: (i, 0)),      # A_hat row stripe (streamed once)
            pl.BlockSpec((g_p, tile), lambda i: (0, i)),      # matching P column stripe
            pl.BlockSpec((n_p, cin_p), lambda i: (0, 0)),     # X   (resident)
            pl.BlockSpec((cin_p, hid_p), lambda i: (0, 0)),   # W1  (resident)
            pl.BlockSpec((1, hid_p), lambda i: (0, 0)),       # b1
            pl.BlockSpec((hid_p, cout_p), lambda i: (0, 0)),  # W2  (resident)
            pl.BlockSpec((1, cout_p), lambda i: (0, 0)),      # b2
        ],
        out_specs=pl.BlockSpec((g_p, cout_p), lambda i: (0, 0)),
        scratch_shapes=[
            pltpu.VMEM((n_p, hid_p), jnp.bfloat16),    # XW1 = X @ W1
            pltpu.VMEM((n_p, cout_p), jnp.bfloat16),   # XW2 = h1 @ W2
            pltpu.VMEM((g_p, n_p), jnp.float32),       # PA  = P @ A_hat accumulator
        ],
    )

    out_p = pl.pallas_call(
        _fused_gcn_kernel,
        out_shape=jax.ShapeDtypeStruct((g_p, cout_p), jnp.float32),
        grid_spec=grid_spec,
        compiler_params=pltpu.CompilerParams(
            dimension_semantics=("arbitrary",),   # axis carries PA / XW2 accumulators
            vmem_limit_bytes=vmem_limit,
        ),
    )(a_hat_p, pool_p, x_p, w1_p, b1_p, w2_p, b2_p)

    return out_p


def normalized_adjacency_padded(edge_index, num_nodes, n_pad, dtype=jnp.bfloat16):
    """A_hat = D^{-1/2}(A + I)D^{-1/2}, built directly at padded size.

    Padding rows/cols stay exactly zero (deg = 0 -> dinv_sqrt = 0).
    Note: .at[...].set deduplicates repeated edges (PyG sums them)."""
    src, dst = edge_index[0], edge_index[1]
    adj = jnp.zeros((n_pad, n_pad), jnp.float32)
    adj = adj.at[dst, src].set(1.0)                    # message flows src -> dst
    diag = jnp.arange(num_nodes)
    adj = adj.at[diag, diag].set(1.0)                  # self-loop weight exactly 1
    deg = adj.sum(axis=1)
    dinv_sqrt = jnp.where(deg > 0, jax.lax.rsqrt(deg), 0.0)
    return (dinv_sqrt[:, None] * adj * dinv_sqrt[None, :]).astype(dtype)


def mean_pool_matrix_padded(batch, num_graphs, n_pad, g_pad, dtype=jnp.bfloat16):
    """P[g, n] = 1/|graph g| if batch[n] == g else 0, built at padded size."""
    pad = n_pad - batch.shape[0]
    batch_p = jnp.concatenate([batch, jnp.full((pad,), -1, batch.dtype)]) if pad else batch
    one_hot = (batch_p[None, :] == jnp.arange(g_pad)[:, None]).astype(jnp.float32)
    counts = one_hot.sum(axis=1, keepdims=True)
    return (one_hot / jnp.maximum(counts, 1.0)).astype(dtype)


def gcn_forward(params, x, edge_index, batch, num_graphs, *, tile=None):
    n = x.shape[0]
    cout = params["conv2_w"].shape[1]

    n_p128 = _round_up(n, _LANE)
    if tile is None:
        tile = _choose_tile(n_p128)
    n_p = _round_up(n_p128, tile)
    g_p = _round_up(num_graphs, _SUBLANE)

    a_hat_p = normalized_adjacency_padded(edge_index, n, n_p)
    pool_p = mean_pool_matrix_padded(batch, num_graphs, n_p, g_p)

    out_p = gcn_fused_forward(
        a_hat_p, pool_p, x,
        params["conv1_w"], params["conv1_b"],
        params["conv2_w"], params["conv2_b"],
        tile=tile,
    )
    return out_p[:num_graphs, :cout]


# --------------------------- params / pure-JAX reference ---------------------------

def glorot(key, shape):
    fan_in, fan_out = shape
    limit = jnp.sqrt(6.0 / (fan_in + fan_out))
    return jax.random.uniform(key, shape, jnp.float32, -limit, limit)


def init_gcn_params(key, channel_in, hidden_channels, channel_out):
    k1, k2, k3, k4, k5 = jax.random.split(key, 5)
    return {
        "conv1_w": glorot(k1, (channel_in, hidden_channels)),
        # small random biases (instead of PyG's zero init) so the bias / fold
        # path is actually exercised by the correctness check.
        "conv1_b": 0.05 * jax.random.normal(k4, (1, hidden_channels), jnp.float32),
        "conv2_w": glorot(k2, (hidden_channels, channel_out)),
        "conv2_b": 0.05 * jax.random.normal(k5, (1, channel_out), jnp.float32),
        # lin1 exists in the module but is unused in forward(); kept for parity.
        "lin1_w": glorot(k3, (hidden_channels, channel_out)),
        "lin1_b": jnp.zeros((1, channel_out), jnp.float32),
    }


def gcn_reference(params, x, edge_index, batch, num_graphs):
    """Plain f32 dense reference of the module forward (eval mode)."""
    n = x.shape[0]
    a = normalized_adjacency_padded(edge_index, n, n, jnp.float32)
    p = mean_pool_matrix_padded(batch, num_graphs, n, num_graphs, jnp.float32)
    h = jnp.maximum(a @ (x @ params["conv1_w"]) + params["conv1_b"], 0.0)
    h2 = a @ (h @ params["conv2_w"]) + params["conv2_b"]
    return p @ h2


# ---------------------------------- main ----------------------------------

if __name__ == "__main__":
    key = jax.random.PRNGKey(0)

    # 2 graphs x 80 nodes (bidirectional chains) -> N = 160, which pads to
    # N_p = 256 with TILE_N = 128, so the streamed/pipelined grid runs 2 steps.
    num_graphs = 2
    nodes_per_graph = 80
    N = num_graphs * nodes_per_graph
    channel_in, hidden_channels, channel_out = 4, 32, 8

    kx, kp = jax.random.split(key)
    x = jax.random.normal(kx, (N, channel_in), jnp.float32)

    src_list, dst_list = [], []
    for g in range(num_graphs):
        base = g * nodes_per_graph
        for i in range(nodes_per_graph - 1):
            src_list += [base + i, base + i + 1]
            dst_list += [base + i + 1, base + i]
    edge_index = jnp.array([src_list, dst_list], dtype=jnp.int32)       # (2, E)
    batch = jnp.repeat(jnp.arange(num_graphs, dtype=jnp.int32), nodes_per_graph)

    params = init_gcn_params(kp, channel_in, hidden_channels, channel_out)

    out = gcn_forward(params, x, edge_index, batch, num_graphs, tile=128)
    out = jax.block_until_ready(out)

    assert out.shape == (num_graphs, channel_out), out.shape
    assert bool(jnp.all(jnp.isfinite(out)))

    # bf16 MXU inputs with f32 accumulation -> small deviation from f32 reference.
    ref = gcn_reference(params, x, edge_index, batch, num_graphs)
    max_err = float(jnp.max(jnp.abs(out - ref)))
    assert max_err < 3e-2, f"max abs err {max_err}"

    print("KERNEL_OK")
</pallas_src>

<mosaic_0001>
module attributes {stable_mosaic.version = 11 : i64} {
  func.func @_fused_gcn_kernel(%arg0: i32, %arg1: memref<128x256xbf16, #tpu.memory_space<vmem>>, %arg2: memref<8x128xbf16, #tpu.memory_space<vmem>>, %arg3: memref<256x128xbf16, #tpu.memory_space<vmem>>, %arg4: memref<128x128xbf16, #tpu.memory_space<vmem>>, %arg5: memref<1x128xf32, #tpu.memory_space<vmem>>, %arg6: memref<128x128xbf16, #tpu.memory_space<vmem>>, %arg7: memref<1x128xf32, #tpu.memory_space<vmem>>, %arg8: memref<8x128xf32, #tpu.memory_space<vmem>>, %arg9: memref<256x128xbf16, #tpu.memory_space<vmem>>, %arg10: memref<256x128xbf16, #tpu.memory_space<vmem>>, %arg11: memref<8x256xf32, #tpu.memory_space<vmem>>) attributes {dimension_semantics = [#tpu.dimension_semantics<arbitrary>], iteration_bounds = array<i64: 2>, scalar_prefetch = 0 : i64, scratch_operands = 3 : i64, tpu.core_type = #tpu.core_type<tc>, window_params = [{transform_indices = @transform_0, window_bounds = array<i64: 128, 256>}, {transform_indices = @transform_1, window_bounds = array<i64: 8, 128>}, {pipeline_mode = #tpu.pipeline_mode<synchronous>, transform_indices = @transform_2, window_bounds = array<i64: 256, 128>}, {pipeline_mode = #tpu.pipeline_mode<synchronous>, transform_indices = @transform_3, window_bounds = array<i64: 128, 128>}, {pipeline_mode = #tpu.pipeline_mode<synchronous>, transform_indices = @transform_4, window_bounds = array<i64: 1, 128>}, {pipeline_mode = #tpu.pipeline_mode<synchronous>, transform_indices = @transform_5, window_bounds = array<i64: 128, 128>}, {pipeline_mode = #tpu.pipeline_mode<synchronous>, transform_indices = @transform_6, window_bounds = array<i64: 1, 128>}, {pipeline_mode = #tpu.pipeline_mode<synchronous>, transform_indices = @transform_7, window_bounds = array<i64: 8, 128>}]} {
    %c0_i32 = arith.constant 0 : i32
    %0 = arith.cmpi eq, %arg0, %c0_i32 : i32
    %1 = arith.extui %0 : i1 to i32
    %c0_i32_0 = arith.constant 0 : i32
    %2 = arith.cmpi ne, %1, %c0_i32_0 : i32
    scf.if %2 {
      %c0_19 = arith.constant 0 : index
      %c0_20 = arith.constant 0 : index
      %27 = vector.load %arg3[%c0_19, %c0_20] : memref<256x128xbf16, #tpu.memory_space<vmem>>, vector<256x128xbf16>
      %c0_21 = arith.constant 0 : index
      %c0_22 = arith.constant 0 : index
      %28 = vector.load %arg4[%c0_21, %c0_22] : memref<128x128xbf16, #tpu.memory_space<vmem>>, vector<128x128xbf16>
      %cst_23 = arith.constant dense<0.000000e+00> : vector<256x128xf32>
      %29 = tpu.matmul %27, %28, %cst_23 {dimension_numbers = #tpu.dot_dimension_numbers<[1], [0], [0], [1], [0, 0, 1, 1], [], []>} : vector<256x128xbf16>, vector<128x128xbf16>, vector<256x128xf32> -> vector<256x128xf32>
      %30 = arith.truncf %29 : vector<256x128xf32> to vector<256x128xbf16>
      %c0_24 = arith.constant 0 : index
      %c0_25 = arith.constant 0 : index
      %31 = vector.load %arg9[%c0_24, %c0_25] : memref<256x128xbf16, #tpu.memory_space<vmem>>, vector<256x128xbf16>
      tpu.vector_store %arg9[%c0_24, %c0_25], %30 {strides = array<i32>} : memref<256x128xbf16, #tpu.memory_space<vmem>>, vector<256x128xbf16>,
      %cst_26 = arith.constant 0.000000e+00 : f32
      %32 = vector.broadcast %cst_26 : f32 to vector<8x256xf32>
      %c0_27 = arith.constant 0 : index
      %c0_28 = arith.constant 0 : index
      %33 = vector.load %arg11[%c0_27, %c0_28] : memref<8x256xf32, #tpu.memory_space<vmem>>, vector<8x256xf32>
      tpu.vector_store %arg11[%c0_27, %c0_28], %32 {strides = array<i32>} : memref<8x256xf32, #tpu.memory_space<vmem>>, vector<8x256xf32>,
    } else {
    }
    %c0 = arith.constant 0 : index
    %c0_1 = arith.constant 0 : index
    %3 = vector.load %arg1[%c0, %c0_1] : memref<128x256xbf16, #tpu.memory_space<vmem>>, vector<128x256xbf16>
    %c0_2 = arith.constant 0 : index
    %c0_3 = arith.constant 0 : index
    %4 = vector.load %arg9[%c0_2, %c0_3] : memref<256x128xbf16, #tpu.memory_space<vmem>>, vector<256x128xbf16>
    %cst = arith.constant dense<0.000000e+00> : vector<128x128xf32>
    %5 = tpu.matmul %3, %4, %cst {dimension_numbers = #tpu.dot_dimension_numbers<[1], [0], [0], [1], [0, 0, 1, 1], [], []>} : vector<128x256xbf16>, vector<256x128xbf16>, vector<128x128xf32> -> vector<128x128xf32>
    %c0_4 = arith.constant 0 : index
    %c0_5 = arith.constant 0 : index
    %6 = vector.load %arg5[%c0_4, %c0_5] : memref<1x128xf32, #tpu.memory_space<vmem>>, vector<1x128xf32>
    %7 = vector.broadcast %6 : vector<1x128xf32> to vector<128x128xf32>
    %8 = arith.addf %5, %7 : vector<128x128xf32>
    %cst_6 = arith.constant 0.000000e+00 : f32
    %9 = vector.broadcast %cst_6 : f32 to vector<128x128xf32>
    %10 = arith.maximumf %8, %9 : vector<128x128xf32>
    %c128_i32 = arith.constant 128 : i32
    %11 = arith.muli %arg0, %c128_i32 : i32
    %12 = tpu.assume_multiple %11, 128 : i32
    %13 = arith.truncf %10 : vector<128x128xf32> to vector<128x128xbf16>
    %c0_7 = arith.constant 0 : index
    %c0_8 = arith.constant 0 : index
    %14 = vector.load %arg6[%c0_7, %c0_8] : memref<128x128xbf16, #tpu.memory_space<vmem>>, vector<128x128xbf16>
    %cst_9 = arith.constant dense<0.000000e+00> : vector<128x128xf32>
    %15 = tpu.matmul %13, %14, %cst_9 {dimension_numbers = #tpu.dot_dimension_numbers<[1], [0], [0], [1], [0, 0, 1, 1], [], []>} : vector<128x128xbf16>, vector<128x128xbf16>, vector<128x128xf32> -> vector<128x128xf32>
    %16 = arith.truncf %15 : vector<128x128xf32> to vector<128x128xbf16>
    %17 = arith.index_cast %12 : i32 to index
    %c0_10 = arith.constant 0 : index
    %18 = vector.load %arg10[%17, %c0_10] : memref<256x128xbf16, #tpu.memory_space<vmem>>, vector<128x128xbf16>
    tpu.vector_store %arg10[%17, %c0_10], %16 {strides = array<i32>} : memref<256x128xbf16, #tpu.memory_space<vmem>>, vector<128x128xbf16>,
    %c0_11 = arith.constant 0 : index
    %c0_12 = arith.constant 0 : index
    %19 = vector.load %arg11[%c0_11, %c0_12] : memref<8x256xf32, #tpu.memory_space<vmem>>, vector<8x256xf32>
    %c0_13 = arith.constant 0 : index
    %c0_14 = arith.constant 0 : index
    %20 = vector.load %arg2[%c0_13, %c0_14] : memref<8x128xbf16, #tpu.memory_space<vmem>>, vector<8x128xbf16>
    %cst_15 = arith.constant dense<0.000000e+00> : vector<8x256xf32>
    %21 = tpu.matmul %20, %3, %cst_15 {dimension_numbers = #tpu.dot_dimension_numbers<[1], [0], [0], [1], [0, 0, 1, 1], [], []>} : vector<8x128xbf16>, vector<128x256xbf16>, vector<8x256xf32> -> vector<8x256xf32>
    %22 = arith.addf %19, %21 : vector<8x256xf32>
    %c0_16 = arith.constant 0 : index
    %c0_17 = arith.constant 0 : index
    %23 = vector.load %arg11[%c0_16, %c0_17] : memref<8x256xf32, #tpu.memory_space<vmem>>, vector<8x256xf32>
    tpu.vector_store %arg11[%c0_16, %c0_17], %22 {strides = array<i32>} : memref<8x256xf32, #tpu.memory_space<vmem>>, vector<8x256xf32>,
    %c1_i32 = arith.constant 1 : i32
    %24 = arith.cmpi eq, %arg0, %c1_i32 : i32
    %25 = arith.extui %24 : i1 to i32
    %c0_i32_18 = arith.constant 0 : i32
    %26 = arith.cmpi ne, %25, %c0_i32_18 : i32
    scf.if %26 {
      %c0_19 = arith.constant 0 : index
      %c0_20 = arith.constant 0 : index
      %27 = vector.load %arg11[%c0_19, %c0_20] : memref<8x256xf32, #tpu.memory_space<vmem>>, vector<8x256xf32>
      %28 = arith.truncf %27 : vector<8x256xf32> to vector<8x256xbf16>
      %c0_21 = arith.constant 0 : index
      %c0_22 = arith.constant 0 : index
      %29 = vector.load %arg10[%c0_21, %c0_22] : memref<256x128xbf16, #tpu.memory_space<vmem>>, vector<256x128xbf16>
      %cst_23 = arith.constant dense<0.000000e+00> : vector<8x128xf32>
      %30 = tpu.matmul %28, %29, %cst_23 {dimension_numbers = #tpu.dot_dimension_numbers<[1], [0], [0], [1], [0, 0, 1, 1], [], []>} : vector<8x256xbf16>, vector<256x128xbf16>, vector<8x128xf32> -> vector<8x128xf32>
      %c0_24 = arith.constant 0 : index
      %c0_25 = arith.constant 0 : index
      %31 = vector.load %arg7[%c0_24, %c0_25] : memref<1x128xf32, #tpu.memory_space<vmem>>, vector<1x128xf32>
      %32 = vector.broadcast %31 : vector<1x128xf32> to vector<8x128xf32>
      %33 = arith.addf %30, %32 : vector<8x128xf32>
      %c0_26 = arith.constant 0 : index
      %c0_27 = arith.constant 0 : index
      %34 = vector.load %arg8[%c0_26, %c0_27] : memref<8x128xf32, #tpu.memory_space<vmem>>, vector<8x128xf32>
      tpu.vector_store %arg8[%c0_26, %c0_27], %33 {strides = array<i32>} : memref<8x128xf32, #tpu.memory_space<vmem>>, vector<8x128xf32>,
    } else {
    }
    return
  }
  func.func @transform_0(%arg0: i32) -> (i32, i32) {
    %c0_i32 = arith.constant 0 : i32
    %c0_i32_0 = arith.constant 0 : i32
    return %arg0, %c0_i32 : i32, i32
  }
  func.func @transform_1(%arg0: i32) -> (i32, i32) {
    %c0_i32 = arith.constant 0 : i32
    %c0_i32_0 = arith.constant 0 : i32
    return %c0_i32, %arg0 : i32, i32
  }
  func.func @transform_2(%arg0: i32) -> (i32, i32) {
    %c0_i32 = arith.constant 0 : i32
    %c0_i32_0 = arith.constant 0 : i32
    %c0_i32_1 = arith.constant 0 : i32
    return %c0_i32, %c0_i32_0 : i32, i32
  }
  func.func @transform_3(%arg0: i32) -> (i32, i32) {
    %c0_i32 = arith.constant 0 : i32
    %c0_i32_0 = arith.constant 0 : i32
    %c0_i32_1 = arith.constant 0 : i32
    return %c0_i32, %c0_i32_0 : i32, i32
  }
  func.func @transform_4(%arg0: i32) -> (i32, i32) {
    %c0_i32 = arith.constant 0 : i32
    %c0_i32_0 = arith.constant 0 : i32
    %c0_i32_1 = arith.constant 0 : i32
    return %c0_i32, %c0_i32_0 : i32, i32
  }
  func.func @transform_5(%arg0: i32) -> (i32, i32) {
    %c0_i32 = arith.constant 0 : i32
    %c0_i32_0 = arith.constant 0 : i32
    %c0_i32_1 = arith.constant 0 : i32
    return %c0_i32, %c0_i32_0 : i32, i32
  }
  func.func @transform_6(%arg0: i32) -> (i32, i32) {
    %c0_i32 = arith.constant 0 : i32
    %c0_i32_0 = arith.constant 0 : i32
    %c0_i32_1 = arith.constant 0 : i32
    return %c0_i32, %c0_i32_0 : i32, i32
  }
  func.func @transform_7(%arg0: i32) -> (i32, i32) {
    %c0_i32 = arith.constant 0 : i32
    %c0_i32_0 = arith.constant 0 : i32
    %c0_i32_1 = arith.constant 0 : i32
    return %c0_i32, %c0_i32_0 : i32, i32
  }
}

</mosaic_0001>

<llo_original>
// kernel: tpu_custom_call.1
$region0: #{tpu_custom_call.1}
  #allocation0 [shape = 'u32[]', space=smem, size = 0x4, offset = 0x4, fixed_abs, tag = 'smem constant byte address 0x4 - core index']
  #allocation1 [shape = 'u32[144,128]{1,0:T(1,128)}', space=vmem, size = 0x12000, scoped, tag = 'internal scratch']
  #allocation2 [shape = 'bf16[256,128]{1,0:T(8,128)(2,1)}', space=vmem, size = 0x10000, scoped, tag = 'scratch operand']
  #allocation3 [shape = 'bf16[256,128]{1,0:T(8,128)(2,1)}', space=vmem, size = 0x10000, scoped, tag = 'scratch operand']
  #allocation4 [shape = 'f32[8,256]{1,0:T(8,128)}', space=vmem, size = 0x2000, scoped, tag = 'scratch operand']
  %s0 = inlined_call_operand.hbm [shape: bf16[256,256], index: 0, kind: input, shape index: {}]
  %s1 = inlined_call_operand.hbm [shape: bf16[8,256], index: 1, kind: input, shape index: {}]
  %s2 = inlined_call_operand.hbm [shape: bf16[256,128], index: 2, kind: input, shape index: {}]
  %s3 = inlined_call_operand.hbm [shape: bf16[128,128], index: 3, kind: input, shape index: {}]
  %s4 = inlined_call_operand.vmem [shape: f32[1,128], index: 4, kind: input, shape index: {}]
  %s5 = inlined_call_operand.hbm [shape: bf16[128,128], index: 5, kind: input, shape index: {}]
  %s6 = inlined_call_operand.vmem [shape: f32[1,128], index: 6, kind: input, shape index: {}]
  %s7 = inlined_call_operand.hbm [shape: f32[8,128], index: 7, kind: output, shape index: {}]
  %s8 = sld [smem:[#allocation0]]
  $region89: #{tpu_custom_call.1} parent=0
    _
  %s10 = ssub.s32 1, %s8
  %s11 = scalar_select 0, %s10, %s8
  $region1: #{tpu_custom_call.1} parent=0
    #allocation5 [shape = 'u8[131072]{0}', space=vmem, size = 0x20000, scoped, tag = 'input window, operand 0']
    #allocation6 [shape = 's32[2]{0}', space=sflag, size = 0x8, scoped, tag = 'scoped memory for tpu_custom_call.1']
    #allocation7 [shape = 's32[2]{0}', space=sflag, size = 0x8, scoped, tag = 'scoped memory for tpu_custom_call.1']
    #allocation8 [shape = 'u8[4096]{0}', space=vmem, size = 0x1000, scoped, tag = 'input window, operand 1']
    #allocation9 [shape = 's32[2]{0}', space=sflag, size = 0x8, scoped, tag = 'scoped memory for tpu_custom_call.1']
    #allocation10 [shape = 'u8[65536]{0}', space=vmem, size = 0x10000, scoped, tag = 'input window, operand 2, single buffered']
    #allocation11 [shape = 'u8[32768]{0}', space=vmem, size = 0x8000, scoped, tag = 'input window, operand 3, single buffered']
    #allocation12 [shape = 's32[1]{0}', space=sflag, size = 0x4, scoped, tag = 'scoped memory for tpu_custom_call.1']
    #allocation13 [shape = 'u8[32768]{0}', space=vmem, size = 0x8000, scoped, tag = 'input window, operand 5, single buffered']
    #allocation14 [shape = 'u8[4096]{0}', space=vmem, size = 0x1000, scoped, tag = 'output window, operand 0, single buffered']
    %12 = vsyncpa [#allocation6], 0
    %s13 = scalar_lea.sflag [#allocation6], 1
    %14 = vsyncpa %s13, 0
    %15 = vsyncpa [#allocation9], 0
    %s16 = scalar_lea.sflag [#allocation9], 1
    %17 = vsyncpa %s16, 0
    %18 = vsyncpa [#allocation12], 0
    %19 = vsyncpa [#allocation7], 0
    loop: start=0, step=1, limit=4
    $region2: #{tpu_custom_call.1} parent=1 // loop_pre_header
      _
    $region3: #{tpu_custom_call.1} parent=1 // loop_header
      %s21 = sphi 0, %s25
      %p22 = scmp.ge.s32.totalorder %s21, 4
      %s31 = sphi 0, %s33
      %s34 = sphi 0, %s31
      %s35 = sphi 0, %s34
      %s51 = sphi 0, %s35
      %s57 = sphi 0, %s59
      %s60 = sphi 0, %s57
      %s61 = sphi 0, %s60
      %s77 = sphi 0, %s61
      %s81 = sphi 0, %s81
      %s83 = sphi 0, %s81
      %s84 = sphi 0, %s83
      %s98 = sphi 0, %s84
      %s102 = sphi 0, %s102
      %s104 = sphi 0, %s102
      %s105 = sphi 0, %s104
      %s119 = sphi 0, %s105
      %s123 = sphi 0, %s123
      %s125 = sphi 0, %s123
      %s126 = sphi 0, %s125
      %s140 = sphi 0, %s126
      %s144 = sphi 0, %s144
      %s146 = sphi 0, %s144
      %s147 = sphi 0, %s146
      %s161 = sphi 0, %s147
      %s165 = sphi 0, %s165
      %s167 = sphi 0, %s165
      %s168 = sphi 0, %s167
      %s182 = sphi 0, %s168
      %s186 = sphi 0, %s186
      %s188 = sphi 0, %s186
      %s189 = sphi 0, %s188
      %s203 = sphi 0, %s189
    $region4: #{tpu_custom_call.1} parent=1 // loop_header_branch
      %24 = sbr.rel (%p22) target = $region8
    $region5: #{tpu_custom_call.1} parent=1 // loop_body
      %s26 = ssub.s32 %s21, 1
      %s27 = ssub.s32 %s21, 2
      %s28 = sadd.s32 %s21, 1
      %s29 = ssub.s32 %s21, %s28
      %p30 = scmp.eq.s32.totalorder %s29, 0
      %s32 = sadd.s32 %s31, 1
      %s33 = scalar_select %p30, %s31, %s32
      %p36 = pneg %p30
      %p37 = scmp.eq.s32.totalorder %s21, 1
      %p38 = por %p36, %p37
      %p39 = scmp.ne.s32.totalorder %s31, %s34
      %p40 = scmp.eq.s32.totalorder %s21, 0
      %p41 = por %p39, %p40
      %p42 = scmp.ne.s32.totalorder %s31, %s34
      %p43 = scmp.eq.s32.totalorder %s26, 1
      %p44 = por %p42, %p43
      %p45 = scmp.ne.s32.totalorder %s34, %s35
      %p46 = scmp.eq.s32.totalorder %s26, 0
      %p47 = por %p45, %p46
      %p48 = scmp.ne.s32.totalorder %s34, %s35
      %p49 = scmp.eq.s32.totalorder %s27, 1
      %p50 = por %p48, %p49
      %p52 = scmp.ne.s32.totalorder %s35, %s51
      %p53 = scmp.eq.s32.totalorder %s27, 0
      %p54 = por %p52, %p53
      %s55 = ssub.s32 %s21, %s28
      %p56 = scmp.eq.s32.totalorder %s55, 0
      %s58 = sadd.s32 %s57, 1
      %s59 = scalar_select %p56, %s57, %s58
      %p62 = pneg %p56
      %p63 = scmp.eq.s32.totalorder %s21, 1
      %p64 = por %p62, %p63
      %p65 = scmp.ne.s32.totalorder %s57, %s60
      %p66 = scmp.eq.s32.totalorder %s21, 0
      %p67 = por %p65, %p66
      %p68 = scmp.ne.s32.totalorder %s57, %s60
      %p69 = scmp.eq.s32.totalorder %s26, 1
      %p70 = por %p68, %p69
      %p71 = scmp.ne.s32.totalorder %s60, %s61
      %p72 = scmp.eq.s32.totalorder %s26, 0
      %p73 = por %p71, %p72
      %p74 = scmp.ne.s32.totalorder %s60, %s61
      %p75 = scmp.eq.s32.totalorder %s27, 1
      %p76 = por %p74, %p75
      %p78 = scmp.ne.s32.totalorder %s61, %s77
      %p79 = scmp.eq.s32.totalorder %s27, 0
      %p80 = por %p78, %p79
      %s82 = sadd.s32 %s81, 1
      %p85 = scmp.eq.s32.totalorder %s21, 1
      %p86 = scmp.ne.s32.totalorder %s81, %s83
      %p87 = scmp.eq.s32.totalorder %s21, 0
      %p88 = por %p86, %p87
      %p89 = scmp.ne.s32.totalorder %s81, %s83
      %p90 = scmp.eq.s32.totalorder %s26, 1
      %p91 = por %p89, %p90
      %p92 = scmp.ne.s32.totalorder %s83, %s84
      %p93 = scmp.eq.s32.totalorder %s26, 0
      %p94 = por %p92, %p93
      %p95 = scmp.ne.s32.totalorder %s83, %s84
      %p96 = scmp.eq.s32.totalorder %s27, 1
      %p97 = por %p95, %p96
      %p99 = scmp.ne.s32.totalorder %s84, %s98
      %p100 = scmp.eq.s32.totalorder %s27, 0
      %p101 = por %p99, %p100
      %s103 = sadd.s32 %s102, 1
      %p106 = scmp.eq.s32.totalorder %s21, 1
      %p107 = scmp.ne.s32.totalorder %s102, %s104
      %p108 = scmp.eq.s32.totalorder %s21, 0
      %p109 = por %p107, %p108
      %p110 = scmp.ne.s32.totalorder %s102, %s104
      %p111 = scmp.eq.s32.totalorder %s26, 1
      %p112 = por %p110, %p111
      %p113 = scmp.ne.s32.totalorder %s104, %s105
      %p114 = scmp.eq.s32.totalorder %s26, 0
      %p115 = por %p113, %p114
      %p116 = scmp.ne.s32.totalorder %s104, %s105
      %p117 = scmp.eq.s32.totalorder %s27, 1
      %p118 = por %p116, %p117
      %p120 = scmp.ne.s32.totalorder %s105, %s119
      %p121 = scmp.eq.s32.totalorder %s27, 0
      %p122 = por %p120, %p121
      %s124 = sadd.s32 %s123, 1
      %p127 = scmp.eq.s32.totalorder %s21, 1
      %p128 = scmp.ne.s32.totalorder %s123, %s125
      %p129 = scmp.eq.s32.totalorder %s21, 0
      %p130 = por %p128, %p129
      %p131 = scmp.ne.s32.totalorder %s123, %s125
      %p132 = scmp.eq.s32.totalorder %s26, 1
      %p133 = por %p131, %p132
      %p134 = scmp.ne.s32.totalorder %s125, %s126
      %p135 = scmp.eq.s32.totalorder %s26, 0
      %p136 = por %p134, %p135
      %p137 = scmp.ne.s32.totalorder %s125, %s126
      %p138 = scmp.eq.s32.totalorder %s27, 1
      %p139 = por %p137, %p138
      %p141 = scmp.ne.s32.totalorder %s126, %s140
      %p142 = scmp.eq.s32.totalorder %s27, 0
      %p143 = por %p141, %p142
      %s145 = sadd.s32 %s144, 1
      %p148 = scmp.eq.s32.totalorder %s21, 1
      %p149 = scmp.ne.s32.totalorder %s144, %s146
      %p150 = scmp.eq.s32.totalorder %s21, 0
      %p151 = por %p149, %p150
      %p152 = scmp.ne.s32.totalorder %s144, %s146
      %p153 = scmp.eq.s32.totalorder %s26, 1
      %p154 = por %p152, %p153
      %p155 = scmp.ne.s32.totalorder %s146, %s147
      %p156 = scmp.eq.s32.totalorder %s26, 0
      %p157 = por %p155, %p156
      %p158 = scmp.ne.s32.totalorder %s146, %s147
      %p159 = scmp.eq.s32.totalorder %s27, 1
      %p160 = por %p158, %p159
      %p162 = scmp.ne.s32.totalorder %s147, %s161
      %p163 = scmp.eq.s32.totalorder %s27, 0
      %p164 = por %p162, %p163
      %s166 = sadd.s32 %s165, 1
      %p169 = scmp.eq.s32.totalorder %s21, 1
      %p170 = scmp.ne.s32.totalorder %s165, %s167
      %p171 = scmp.eq.s32.totalorder %s21, 0
      %p172 = por %p170, %p171
      %p173 = scmp.ne.s32.totalorder %s165, %s167
      %p174 = scmp.eq.s32.totalorder %s26, 1
      %p175 = por %p173, %p174
      %p176 = scmp.ne.s32.totalorder %s167, %s168
      %p177 = scmp.eq.s32.totalorder %s26, 0
      %p178 = por %p176, %p177
      %p179 = scmp.ne.s32.totalorder %s167, %s168
      %p180 = scmp.eq.s32.totalorder %s27, 1
      %p181 = por %p179, %p180
      %p183 = scmp.ne.s32.totalorder %s168, %s182
      %p184 = scmp.eq.s32.totalorder %s27, 0
      %p185 = por %p183, %p184
      %s187 = sadd.s32 %s186, 1
      %p190 = scmp.eq.s32.totalorder %s21, 1
      %p191 = scmp.ne.s32.totalorder %s186, %s188
      %p192 = scmp.eq.s32.totalorder %s21, 0
      %p193 = por %p191, %p192
      %p194 = scmp.ne.s32.totalorder %s186, %s188
      %p195 = scmp.eq.s32.totalorder %s26, 1
      %p196 = por %p194, %p195
      %p197 = scmp.ne.s32.totalorder %s188, %s189
      %p198 = scmp.eq.s32.totalorder %s26, 0
      %p199 = por %p197, %p198
      %p200 = scmp.ne.s32.totalorder %s188, %s189
      %p201 = scmp.eq.s32.totalorder %s27, 1
      %p202 = por %p200, %p201
      %p204 = scmp.ne.s32.totalorder %s189, %s203
      %p205 = scmp.eq.s32.totalorder %s27, 0
      %p206 = por %p204, %p205
      %p207 = scmp.le.s32.totalorder 1, %s21
      %p208 = scmp.lt.s32.totalorder %s21, 3
      %p209 = pnand %p207, %p208
      %p210 = pneg %p209
      // Predicated region
      $region9: #{tpu_custom_call.1} parent=5 // pred_check
        _
      $region10: #{tpu_custom_call.1} parent=5 // pred_check_branch
        %212 = sbr.rel (%p209) target = $region12
      $region11: #{tpu_custom_call.1} parent=5 // pred_region
        %s213 = ssub.s32 %s21, 1
        // Predicated region
        $region13: #{tpu_custom_call.1} parent=11 // pred_check
          %p214 = pneg %p94
        $region14: #{tpu_custom_call.1} parent=11 // pred_check_branch
          %216 = sbr.rel (%p214) target = $region16
        $region15: #{tpu_custom_call.1} parent=11 // pred_region
          %s218 = ssub.s32 2048, 2048
          %219 = vsyncadd [#allocation9], %s218
          %s220 = sshll.u32 [#allocation10], 4
          %s221 = int_to_ptr.vmem [resolvable:$true] %s220
          %226 = dma.hbm_to_vmem [thread:$0]  %s2, 2048, %s221, [#allocation9], 64, 64, 4
        $region16: #{tpu_custom_call.1} parent=11 // pred_fallthru
          _
        // Predicated region
        $region17: #{tpu_custom_call.1} parent=11 // pred_check
          %p227 = pneg %p115
        $region18: #{tpu_custom_call.1} parent=11 // pred_check_branch
          %229 = sbr.rel (%p227) target = $region20
        $region19: #{tpu_custom_call.1} parent=11 // pred_region
          %s231 = ssub.s32 1024, 1024
          %232 = vsyncadd [#allocation12], %s231
          %s233 = sshll.u32 [#allocation11], 4
          %s234 = int_to_ptr.vmem [resolvable:$true] %s233
          %239 = dma.hbm_to_vmem [thread:$0]  %s3, 1024, %s234, [#allocation12], 64, 64, 4
        $region20: #{tpu_custom_call.1} parent=11 // pred_fallthru
          _
        // Predicated region
        $region21: #{tpu_custom_call.1} parent=11 // pred_check
          %p240 = pneg %p136
        $region22: #{tpu_custom_call.1} parent=11 // pred_check_branch
          %242 = sbr.rel (%p240) target = $region24
        $region23: #{tpu_custom_call.1} parent=11 // pred_region
          _
        $region24: #{tpu_custom_call.1} parent=11 // pred_fallthru
          _
        // Predicated region
        $region25: #{tpu_custom_call.1} parent=11 // pred_check
          %p243 = pneg %p157
        $region26: #{tpu_custom_call.1} parent=11 // pred_check_branch
          %245 = sbr.rel (%p243) target = $region28
        $region27: #{tpu_custom_call.1} parent=11 // pred_region
          %s247 = ssub.s32 1024, 1024
          %248 = vsyncadd [#allocation12], %s247
          %s249 = sshll.u32 [#allocation13], 4
          %s250 = int_to_ptr.vmem [resolvable:$true] %s249
          %255 = dma.hbm_to_vmem [thread:$0]  %s5, 1024, %s250, [#allocation12], 64, 64, 4
        $region28: #{tpu_custom_call.1} parent=11 // pred_fallthru
          _
        // Predicated region
        $region29: #{tpu_custom_call.1} parent=11 // pred_check
          %p256 = pneg %p178
        $region30: #{tpu_custom_call.1} parent=11 // pred_check_branch
          %258 = sbr.rel (%p256) target = $region32
        $region31: #{tpu_custom_call.1} parent=11 // pred_region
          _
        $region32: #{tpu_custom_call.1} parent=11 // pred_fallthru
          _
      $region12: #{tpu_custom_call.1} parent=5 // pred_fallthru
        _
      %p259 = scmp.lt.s32.totalorder %s21, 2
      // Predicated region
      $region33: #{tpu_custom_call.1} parent=5 // pred_check
        %p260 = pneg %p259
      $region34: #{tpu_custom_call.1} parent=5 // pred_check_branch
        %262 = sbr.rel (%p260) target = $region36
      $region35: #{tpu_custom_call.1} parent=5 // pred_region
        // Predicated region
        $region37: #{tpu_custom_call.1} parent=35 // pred_check
          %p263 = pneg %p41
        $region38: #{tpu_custom_call.1} parent=35 // pred_check_branch
          %265 = sbr.rel (%p263) target = $region40
        $region39: #{tpu_custom_call.1} parent=35 // pred_region
          %s266 = sand.u32 %s31, 1
          %s267 = scalar_lea.sflag [#allocation6], %s266
          %s268 = sand.u32 %s31, 1
          %s269 = smul.addr %s268, 128
          %s270 = scalar_lea.vmem [#allocation5], %s269
          %s271 = smul.u32 16, %s21
          %s273 = ssub.s32 2048, 2048
          %274 = vsyncadd %s267, %s273
          %s275 = smul.addr %s271, 2
          %s276 = smul.addr %s275, 64
          %s277 = scalar_lea.hbm %s0, %s276
          %s278 = sshll.u32 %s270, 4
          %s279 = int_to_ptr.vmem [resolvable:$true] %s278
          %284 = dma.hbm_to_vmem [thread:$0]  %s277, 2048, %s279, %s267, 128, 128, 8
        $region40: #{tpu_custom_call.1} parent=35 // pred_fallthru
          _
        // Predicated region
        $region41: #{tpu_custom_call.1} parent=35 // pred_check
          %p285 = pneg %p67
        $region42: #{tpu_custom_call.1} parent=35 // pred_check_branch
          %287 = sbr.rel (%p285) target = $region44
        $region43: #{tpu_custom_call.1} parent=35 // pred_region
          %s288 = sand.u32 %s21, 1
          %s289 = scalar_lea.sflag [#allocation9], %s288
          %s290 = sand.u32 %s57, 1
          %s291 = smul.addr %s290, 4
          %s292 = scalar_lea.vmem [#allocation8], %s291
          %s294 = ssub.s32 64, 64
          %295 = vsyncadd %s289, %s294
          %s296 = smul.addr %s21, 64
          %s297 = scalar_lea.hbm %s1, %s296
          %s299 = sshll.u32 %s292, 4
          %s300 = int_to_ptr.vmem [resolvable:$true] %s299
          %302 = dma.hbm_to_vmem [thread:$0]  %s297, 64, %s300, %s289
        $region44: #{tpu_custom_call.1} parent=35 // pred_fallthru
          _
      $region36: #{tpu_custom_call.1} parent=5 // pred_fallthru
        _
      %p303 = scmp.le.s32.totalorder 1, %s21
      %p304 = scmp.lt.s32.totalorder %s21, 3
      %p305 = pnand %p303, %p304
      %p306 = pneg %p305
      // Predicated region
      $region45: #{tpu_custom_call.1} parent=5 // pred_check
        _
      $region46: #{tpu_custom_call.1} parent=5 // pred_check_branch
        %308 = sbr.rel (%p305) target = $region48
      $region47: #{tpu_custom_call.1} parent=5 // pred_region
        %s309 = ssub.s32 %s21, 1
        %s310 = sand.u32 %s34, 1
        %s311 = scalar_lea.sflag [#allocation6], %s310
        %s312 = sand.u32 %s34, 1
        %s313 = smul.addr %s312, 128
        %s314 = scalar_lea.vmem [#allocation5], %s313
        // Predicated region
        $region49: #{tpu_custom_call.1} parent=47 // pred_check
          %p315 = pneg %p47
        $region50: #{tpu_custom_call.1} parent=47 // pred_check_branch
          %317 = sbr.rel (%p315) target = $region52
        $region51: #{tpu_custom_call.1} parent=47 // pred_region
          %318 = dma.done %s311, 2048
        $region52: #{tpu_custom_call.1} parent=47 // pred_fallthru
          _
        %s319 = sand.u32 %s26, 1
        %s320 = scalar_lea.sflag [#allocation9], %s319
        %s321 = sand.u32 %s60, 1
        %s322 = smul.addr %s321, 4
        %s323 = scalar_lea.vmem [#allocation8], %s322
        // Predicated region
        $region53: #{tpu_custom_call.1} parent=47 // pred_check
          %p324 = pneg %p73
        $region54: #{tpu_custom_call.1} parent=47 // pred_check_branch
          %326 = sbr.rel (%p324) target = $region56
        $region55: #{tpu_custom_call.1} parent=47 // pred_region
          %327 = dma.done %s320, 64
        $region56: #{tpu_custom_call.1} parent=47 // pred_fallthru
          _
        // Predicated region
        $region57: #{tpu_custom_call.1} parent=47 // pred_check
          %p328 = pneg %p94
        $region58: #{tpu_custom_call.1} parent=47 // pred_check_branch
          %330 = sbr.rel (%p328) target = $region60
        $region59: #{tpu_custom_call.1} parent=47 // pred_region
          %331 = dma.done [#allocation9], 2048
        $region60: #{tpu_custom_call.1} parent=47 // pred_fallthru
          _
        // Predicated region
        $region61: #{tpu_custom_call.1} parent=47 // pred_check
          %p332 = pneg %p115
        $region62: #{tpu_custom_call.1} parent=47 // pred_check_branch
          %334 = sbr.rel (%p332) target = $region64
        $region63: #{tpu_custom_call.1} parent=47 // pred_region
          %335 = dma.done [#allocation12], 1024
        $region64: #{tpu_custom_call.1} parent=47 // pred_fallthru
          _
        // Predicated region
        $region65: #{tpu_custom_call.1} parent=47 // pred_check
          %p336 = pneg %p157
        $region66: #{tpu_custom_call.1} parent=47 // pred_check_branch
          %338 = sbr.rel (%p336) target = $region68
        $region67: #{tpu_custom_call.1} parent=47 // pred_region
          %339 = dma.done [#allocation12], 1024
        $region68: #{tpu_custom_call.1} parent=47 // pred_fallthru
          _
        %s340 = sand.u32 %s34, 1
        %s341 = scalar_lea.sflag [#allocation6], %s340
        %s342 = sand.u32 %s34, 1
        %s343 = smul.addr %s342, 128
        %s344 = scalar_lea.vmem [#allocation5], %s343
        %p345 = pneg %p47
        %p346 = pneg %p44
        %s347 = sand.u32 %s26, 1
        %s348 = scalar_lea.sflag [#allocation9], %s347
        %s349 = sand.u32 %s60, 1
        %s350 = smul.addr %s349, 4
        %s351 = scalar_lea.vmem [#allocation8], %s350
        %p352 = pneg %p73
        %p353 = pneg %p70
        %p354 = pneg %p94
        %p355 = pneg %p91
        %p356 = pneg %p115
        %p357 = pneg %p112
        %p358 = pneg %p136
        %p359 = pneg %p133
        %p360 = pneg %p157
        %p361 = pneg %p154
        %p362 = pneg %p178
        %p363 = pneg %p175
        %p364 = pneg %p199
        %p365 = pneg %p196
        %s366 = smul.u32 16, %s26
        %p368 = scmp.eq.s32.totalorder %s26, 0
        // Predicated region
        $region69: #{tpu_custom_call.1} parent=47 // pred_check
          %p369 = pneg %p368
        $region70: #{tpu_custom_call.1} parent=47 // pred_check_branch
          %371 = sbr.rel (%p369) target = $region72
        $region71: #{tpu_custom_call.1} parent=47 // pred_region
          %v372 = vld [vmem:[#allocation10] sm:$0xf]
          %v373 = vld [vmem:[#allocation10 + $0x4] sm:$0xf]
          %v374 = vld [vmem:[#allocation10 + $0x8] sm:$0xf]
          %v375 = vld [vmem:[#allocation10 + $0xc] sm:$0xf]
          %v376 = vld [vmem:[#allocation10 + $0x10] sm:$0xf]
          %v377 = vld [vmem:[#allocation10 + $0x14] sm:$0xf]
          %v378 = vld [vmem:[#allocation10 + $0x18] sm:$0xf]
          %v379 = vld [vmem:[#allocation10 + $0x1c] sm:$0xf]
          %v380 = vld [vmem:[#allocation10 + $0x20] sm:$0xf]
          %v381 = vld [vmem:[#allocation10 + $0x24] sm:$0xf]
          %v382 = vld [vmem:[#allocation10 + $0x28] sm:$0xf]
          %v383 = vld [vmem:[#allocation10 + $0x2c] sm:$0xf]
          %v384 = vld [vmem:[#allocation10 + $0x30] sm:$0xf]
          %v385 = vld [vmem:[#allocation10 + $0x34] sm:$0xf]
          %v386 = vld [vmem:[#allocation10 + $0x38] sm:$0xf]
          %v387 = vld [vmem:[#allocation10 + $0x3c] sm:$0xf]
          %v388 = vld [vmem:[#allocation10 + $0x40] sm:$0xf]
          %v389 = vld [vmem:[#allocation10 + $0x44] sm:$0xf]
          %v390 = vld [vmem:[#allocation10 + $0x48] sm:$0xf]
          %v391 = vld [vmem:[#allocation10 + $0x4c] sm:$0xf]
          %v392 = vld [vmem:[#allocation10 + $0x50] sm:$0xf]
          %v393 = vld [vmem:[#allocation10 + $0x54] sm:$0xf]
          %v394 = vld [vmem:[#allocation10 + $0x58] sm:$0xf]
          %v395 = vld [vmem:[#allocation10 + $0x5c] sm:$0xf]
          %v396 = vld [vmem:[#allocation10 + $0x60] sm:$0xf]
          %v397 = vld [vmem:[#allocation10 + $0x64] sm:$0xf]
          %v398 = vld [vmem:[#allocation10 + $0x68] sm:$0xf]
          %v399 = vld [vmem:[#allocation10 + $0x6c] sm:$0xf]
          %v400 = vld [vmem:[#allocation10 + $0x70] sm:$0xf]
          %v401 = vld [vmem:[#allocation10 + $0x74] sm:$0xf]
          %v402 = vld [vmem:[#allocation10 + $0x78] sm:$0xf]
          %v403 = vld [vmem:[#allocation10 + $0x7c] sm:$0xf]
          %v404 = vld [vmem:[#allocation11] sm:$0xf]
          %v405 = vld [vmem:[#allocation11 + $0x4] sm:$0xf]
          %v406 = vld [vmem:[#allocation11 + $0x8] sm:$0xf]
          %v407 = vld [vmem:[#allocation11 + $0xc] sm:$0xf]
          %v408 = vld [vmem:[#allocation11 + $0x10] sm:$0xf]
          %v409 = vld [vmem:[#allocation11 + $0x14] sm:$0xf]
          %v410 = vld [vmem:[#allocation11 + $0x18] sm:$0xf]
          %v411 = vld [vmem:[#allocation11 + $0x1c] sm:$0xf]
          %v412 = vld [vmem:[#allocation11 + $0x20] sm:$0xf]
          %v413 = vld [vmem:[#allocation11 + $0x24] sm:$0xf]
          %v414 = vld [vmem:[#allocation11 + $0x28] sm:$0xf]
          %v415 = vld [vmem:[#allocation11 + $0x2c] sm:$0xf]
          %v416 = vld [vmem:[#allocation11 + $0x30] sm:$0xf]
          %v417 = vld [vmem:[#allocation11 + $0x34] sm:$0xf]
          %v418 = vld [vmem:[#allocation11 + $0x38] sm:$0xf]
          %v419 = vld [vmem:[#allocation11 + $0x3c] sm:$0xf]
          %v452 = vunpack.c.l.b16 %v372
          %v453 = vunpack.c.l.b16 %v373
          %v454 = vunpack.c.l.b16 %v374
          %v455 = vunpack.c.l.b16 %v375
          %v456 = vunpack.c.l.b16 %v376
          %v457 = vunpack.c.l.b16 %v377
          %v458 = vunpack.c.l.b16 %v378
          %v459 = vunpack.c.l.b16 %v379
          %v460 = vunpack.c.l.b16 %v380
          %v461 = vunpack.c.l.b16 %v381
          %v462 = vunpack.c.l.b16 %v382
          %v463 = vunpack.c.l.b16 %v383
          %v464 = vunpack.c.l.b16 %v384
          %v465 = vunpack.c.l.b16 %v385
          %v466 = vunpack.c.l.b16 %v386
          %v467 = vunpack.c.l.b16 %v387
          %v468 = vunpack.c.l.b16 %v388
          %v469 = vunpack.c.l.b16 %v389
          %v470 = vunpack.c.l.b16 %v390
          %v471 = vunpack.c.l.b16 %v391
          %v472 = vunpack.c.l.b16 %v392
          %v473 = vunpack.c.l.b16 %v393
          %v474 = vunpack.c.l.b16 %v394
          %v475 = vunpack.c.l.b16 %v395
          %v476 = vunpack.c.l.b16 %v396
          %v477 = vunpack.c.l.b16 %v397
          %v478 = vunpack.c.l.b16 %v398
          %v479 = vunpack.c.l.b16 %v399
          %v480 = vunpack.c.l.b16 %v400
          %v481 = vunpack.c.l.b16 %v401
          %v482 = vunpack.c.l.b16 %v402
          %v483 = vunpack.c.l.b16 %v403
          %v484 = vpack.c.b16 %v453, %v452
          %v485 = vpack.c.b16 %v455, %v454
          %v486 = vpack.c.b16 %v457, %v456
          %v487 = vpack.c.b16 %v459, %v458
          %v488 = vpack.c.b16 %v461, %v460
          %v489 = vpack.c.b16 %v463, %v462
          %v490 = vpack.c.b16 %v465, %v464
          %v491 = vpack.c.b16 %v467, %v466
          %v492 = vpack.c.b16 %v469, %v468
          %v493 = vpack.c.b16 %v471, %v470
          %v494 = vpack.c.b16 %v473, %v472
          %v495 = vpack.c.b16 %v475, %v474
          %v496 = vpack.c.b16 %v477, %v476
          %v497 = vpack.c.b16 %v479, %v478
          %v498 = vpack.c.b16 %v481, %v480
          %v499 = vpack.c.b16 %v483, %v482
          %v532 = vunpack.c.l.b16 %v404
          %v533 = vunpack.c.l.b16 %v405
          %v534 = vunpack.c.l.b16 %v406
          %v535 = vunpack.c.l.b16 %v407
          %v536 = vunpack.c.l.b16 %v408
          %v537 = vunpack.c.l.b16 %v409
          %v538 = vunpack.c.l.b16 %v410
          %v539 = vunpack.c.l.b16 %v411
          %v540 = vunpack.c.l.b16 %v412
          %v541 = vunpack.c.l.b16 %v413
          %v542 = vunpack.c.l.b16 %v414
          %v543 = vunpack.c.l.b16 %v415
          %v544 = vunpack.c.l.b16 %v416
          %v545 = vunpack.c.l.b16 %v417
          %v546 = vunpack.c.l.b16 %v418
          %v547 = vunpack.c.l.b16 %v419
          %v548 = vpack.c.b16 %v533, %v532
          %v549 = vpack.c.b16 %v535, %v534
          %v550 = vpack.c.b16 %v537, %v536
          %v551 = vpack.c.b16 %v539, %v538
          %v552 = vpack.c.b16 %v541, %v540
          %v553 = vpack.c.b16 %v543, %v542
          %v554 = vpack.c.b16 %v545, %v544
          %v555 = vpack.c.b16 %v547, %v546
          %564 = vmatprep.subr.bf16.mxu0 0
          %565 = vmatpush1.bf16.msra.mxu0 %v555
          %566 = vmatprep.subr.bf16.mxu0 0
          %567 = vmatpush1.bf16.msra.mxu0 %v554
          %568 = vmatprep.subr.bf16.mxu0 0
          %569 = vmatpush1.bf16.msra.mxu0 %v553
          %570 = vmatprep.subr.bf16.mxu0 0
          %571 = vmatpush1.bf16.msra.mxu0 %v552
          %572 = vmatprep.subr.bf16.mxu0 0
          %573 = vmatpush1.bf16.msra.mxu0 %v551
          %574 = vmatprep.subr.bf16.mxu0 0
          %575 = vmatpush1.bf16.msra.mxu0 %v550
          %576 = vmatprep.subr.bf16.mxu0 0
          %577 = vmatpush1.bf16.msra.mxu0 %v549
          %578 = vmatprep.subr.bf16.mxu0 0
          %579 = vmatpush1.bf16.msra.mxu0 %v548
          %580 = vmatprep.subr.bf16.mxu0 0
          %581 = vmatpush2.bf16.msra.mxu0 0
          %582 = vmatprep.subr.bf16.mxu0 0
          %583 = vmatpush2.bf16.msra.mxu0 0
          %584 = vmatprep.subr.bf16.mxu0 0
          %585 = vmatpush2.bf16.msra.mxu0 0
          %586 = vmatprep.subr.bf16.mxu0 0
          %587 = vmatpush2.bf16.msra.mxu0 0
          %588 = vmatprep.subr.bf16.mxu0 0
          %589 = vmatpush2.bf16.msra.mxu0 0
          %590 = vmatprep.subr.bf16.mxu0 0
          %591 = vmatpush2.bf16.msra.mxu0 0
          %592 = vmatprep.subr.bf16.mxu0 0
          %593 = vmatpush2.bf16.msra.mxu0 0
          %594 = vmatprep.subr.bf16.mxu0 0
          %595 = vmatpush2.bf16.msra.mxu0 0
          %596 = vmatprep.mubr.bf16.mxu0 0
          %597 = vmatmul.mubr.bf16.gmra.mxu0 %v484
          %v598 = vpop.f32.mrf.mxu0
          %v599 = vadd.f32 0.0, %v598
          %v600 = vpop.f32.mrf.mxu0
          %v601 = vpop.f32.mrf.mxu0
          %v602 = vadd.f32 0.0, %v601
          %v603 = vpop.f32.mrf.mxu0
          %604 = vmatprep.mubr.bf16.mxu0 0
          %605 = vmatmul.mubr.bf16.gmra.mxu0 %v485
          %v606 = vpop.f32.mrf.mxu0
          %v607 = vadd.f32 0.0, %v606
          %v608 = vpop.f32.mrf.mxu0
          %v609 = vpop.f32.mrf.mxu0
          %v610 = vadd.f32 0.0, %v609
          %v611 = vpop.f32.mrf.mxu0
          %612 = vmatprep.mubr.bf16.mxu0 0
          %613 = vmatmul.mubr.bf16.gmra.mxu0 %v486
          %v614 = vpop.f32.mrf.mxu0
          %v615 = vadd.f32 0.0, %v614
          %v616 = vpop.f32.mrf.mxu0
          %v617 = vpop.f32.mrf.mxu0
          %v618 = vadd.f32 0.0, %v617
          %v619 = vpop.f32.mrf.mxu0
          %620 = vmatprep.mubr.bf16.mxu0 0
          %621 = vmatmul.mubr.bf16.gmra.mxu0 %v487
          %v622 = vpop.f32.mrf.mxu0
          %v623 = vadd.f32 0.0, %v622
          %v624 = vpop.f32.mrf.mxu0
          %v625 = vpop.f32.mrf.mxu0
          %v626 = vadd.f32 0.0, %v625
          %v627 = vpop.f32.mrf.mxu0
          %628 = vmatprep.mubr.bf16.mxu0 0
          %629 = vmatmul.mubr.bf16.gmra.mxu0 %v488
          %v630 = vpop.f32.mrf.mxu0
          %v631 = vadd.f32 0.0, %v630
          %v632 = vpop.f32.mrf.mxu0
          %v633 = vpop.f32.mrf.mxu0
          %v634 = vadd.f32 0.0, %v633
          %v635 = vpop.f32.mrf.mxu0
          %636 = vmatprep.mubr.bf16.mxu0 0
          %637 = vmatmul.mubr.bf16.gmra.mxu0 %v489
          %v638 = vpop.f32.mrf.mxu0
          %v639 = vadd.f32 0.0, %v638
          %v640 = vpop.f32.mrf.mxu0
          %v641 = vpop.f32.mrf.mxu0
          %v642 = vadd.f32 0.0, %v641
          %v643 = vpop.f32.mrf.mxu0
          %644 = vmatprep.mubr.bf16.mxu0 0
          %645 = vmatmul.mubr.bf16.gmra.mxu0 %v490
          %v646 = vpop.f32.mrf.mxu0
          %v647 = vadd.f32 0.0, %v646
          %v648 = vpop.f32.mrf.mxu0
          %v649 = vpop.f32.mrf.mxu0
          %v650 = vadd.f32 0.0, %v649
          %v651 = vpop.f32.mrf.mxu0
          %652 = vmatprep.mubr.bf16.mxu0 0
          %653 = vmatmul.mubr.bf16.gmra.mxu0 %v491
          %v654 = vpop.f32.mrf.mxu0
          %v655 = vadd.f32 0.0, %v654
          %v656 = vpop.f32.mrf.mxu0
          %v657 = vpop.f32.mrf.mxu0
          %v658 = vadd.f32 0.0, %v657
          %v659 = vpop.f32.mrf.mxu0
          %660 = vmatprep.mubr.bf16.mxu0 0
          %661 = vmatmul.mubr.bf16.gmra.mxu0 %v492
          %v662 = vpop.f32.mrf.mxu0
          %v663 = vadd.f32 0.0, %v662
          %v664 = vpop.f32.mrf.mxu0
          %v665 = vpop.f32.mrf.mxu0
          %v666 = vadd.f32 0.0, %v665
          %v667 = vpop.f32.mrf.mxu0
          %668 = vmatprep.mubr.bf16.mxu0 0
          %669 = vmatmul.mubr.bf16.gmra.mxu0 %v493
          %v670 = vpop.f32.mrf.mxu0
          %v671 = vadd.f32 0.0, %v670
          %v672 = vpop.f32.mrf.mxu0
          %v673 = vpop.f32.mrf.mxu0
          %v674 = vadd.f32 0.0, %v673
          %v675 = vpop.f32.mrf.mxu0
          %676 = vmatprep.mubr.bf16.mxu0 0
          %677 = vmatmul.mubr.bf16.gmra.mxu0 %v494
          %v678 = vpop.f32.mrf.mxu0
          %v679 = vadd.f32 0.0, %v678
          %v680 = vpop.f32.mrf.mxu0
          %v681 = vpop.f32.mrf.mxu0
          %v682 = vadd.f32 0.0, %v681
          %v683 = vpop.f32.mrf.mxu0
          %684 = vmatprep.mubr.bf16.mxu0 0
          %685 = vmatmul.mubr.bf16.gmra.mxu0 %v495
          %v686 = vpop.f32.mrf.mxu0
          %v687 = vadd.f32 0.0, %v686
          %v688 = vpop.f32.mrf.mxu0
          %v689 = vpop.f32.mrf.mxu0
          %v690 = vadd.f32 0.0, %v689
          %v691 = vpop.f32.mrf.mxu0
          %692 = vmatprep.mubr.bf16.mxu0 0
          %693 = vmatmul.mubr.bf16.gmra.mxu0 %v496
          %v694 = vpop.f32.mrf.mxu0
          %v695 = vadd.f32 0.0, %v694
          %v696 = vpop.f32.mrf.mxu0
          %v697 = vpop.f32.mrf.mxu0
          %v698 = vadd.f32 0.0, %v697
          %v699 = vpop.f32.mrf.mxu0
          %700 = vmatprep.mubr.bf16.mxu0 0
          %701 = vmatmul.mubr.bf16.gmra.mxu0 %v497
          %v702 = vpop.f32.mrf.mxu0
          %v703 = vadd.f32 0.0, %v702
          %v704 = vpop.f32.mrf.mxu0
          %v705 = vpop.f32.mrf.mxu0
          %v706 = vadd.f32 0.0, %v705
          %v707 = vpop.f32.mrf.mxu0
          %708 = vmatprep.mubr.bf16.mxu0 0
          %709 = vmatmul.mubr.bf16.gmra.mxu0 %v498
          %v710 = vpop.f32.mrf.mxu0
          %v711 = vadd.f32 0.0, %v710
          %v712 = vpop.f32.mrf.mxu0
          %v713 = vpop.f32.mrf.mxu0
          %v714 = vadd.f32 0.0, %v713
          %v715 = vpop.f32.mrf.mxu0
          %716 = vmatprep.mubr.bf16.mxu0 0
          %717 = vmatmul.mubr.bf16.gmra.mxu0 %v499
          %v718 = vpop.f32.mrf.mxu0
          %v719 = vadd.f32 0.0, %v718
          %v720 = vpop.f32.mrf.mxu0
          %v721 = vpop.f32.mrf.mxu0
          %v722 = vadd.f32 0.0, %v721
          %v723 = vpop.f32.mrf.mxu0
          %724 = vdwg.mxu0
          %v725 = vpack.c.bf16 %v602, %v599
          %v726 = vpack.c.bf16 %v610, %v607
          %v727 = vpack.c.bf16 %v618, %v615
          %v728 = vpack.c.bf16 %v626, %v623
          %v729 = vpack.c.bf16 %v634, %v631
          %v730 = vpack.c.bf16 %v642, %v639
          %v731 = vpack.c.bf16 %v650, %v647
          %v732 = vpack.c.bf16 %v658, %v655
          %v733 = vpack.c.bf16 %v666, %v663
          %v734 = vpack.c.bf16 %v674, %v671
          %v735 = vpack.c.bf16 %v682, %v679
          %v736 = vpack.c.bf16 %v690, %v687
          %v737 = vpack.c.bf16 %v698, %v695
          %v738 = vpack.c.bf16 %v706, %v703
          %v739 = vpack.c.bf16 %v714, %v711
          %v740 = vpack.c.bf16 %v722, %v719
          %v757 = vunpack.c.l.b16 %v725
          %v758 = vunpack.c.h.b16 %v725
          %v759 = vunpack.c.l.b16 %v726
          %v760 = vunpack.c.h.b16 %v726
          %v761 = vunpack.c.l.b16 %v727
          %v762 = vunpack.c.h.b16 %v727
          %v763 = vunpack.c.l.b16 %v728
          %v764 = vunpack.c.h.b16 %v728
          %v765 = vunpack.c.l.b16 %v729
          %v766 = vunpack.c.h.b16 %v729
          %v767 = vunpack.c.l.b16 %v730
          %v768 = vunpack.c.h.b16 %v730
          %v769 = vunpack.c.l.b16 %v731
          %v770 = vunpack.c.h.b16 %v731
          %v771 = vunpack.c.l.b16 %v732
          %v772 = vunpack.c.h.b16 %v732
          %v773 = vunpack.c.l.b16 %v733
          %v774 = vunpack.c.h.b16 %v733
          %v775 = vunpack.c.l.b16 %v734
          %v776 = vunpack.c.h.b16 %v734
          %v777 = vunpack.c.l.b16 %v735
          %v778 = vunpack.c.h.b16 %v735
          %v779 = vunpack.c.l.b16 %v736
          %v780 = vunpack.c.h.b16 %v736
          %v781 = vunpack.c.l.b16 %v737
          %v782 = vunpack.c.h.b16 %v737
          %v783 = vunpack.c.l.b16 %v738
          %v784 = vunpack.c.h.b16 %v738
          %v785 = vunpack.c.l.b16 %v739
          %v786 = vunpack.c.h.b16 %v739
          %v787 = vunpack.c.l.b16 %v740
          %v788 = vunpack.c.h.b16 %v740
          %v789 = vpack.c.b16 %v757, %v757
          %v790 = vpack.c.b16 %v758, %v758
          %v791 = vpack.c.b16 %v759, %v759
          %v792 = vpack.c.b16 %v760, %v760
          %v793 = vpack.c.b16 %v761, %v761
          %v794 = vpack.c.b16 %v762, %v762
          %v795 = vpack.c.b16 %v763, %v763
          %v796 = vpack.c.b16 %v764, %v764
          %v797 = vpack.c.b16 %v765, %v765
          %v798 = vpack.c.b16 %v766, %v766
          %v799 = vpack.c.b16 %v767, %v767
          %v800 = vpack.c.b16 %v768, %v768
          %v801 = vpack.c.b16 %v769, %v769
          %v802 = vpack.c.b16 %v770, %v770
          %v803 = vpack.c.b16 %v771, %v771
          %v804 = vpack.c.b16 %v772, %v772
          %v805 = vpack.c.b16 %v773, %v773
          %v806 = vpack.c.b16 %v774, %v774
          %v807 = vpack.c.b16 %v775, %v775
          %v808 = vpack.c.b16 %v776, %v776
          %v809 = vpack.c.b16 %v777, %v777
          %v810 = vpack.c.b16 %v778, %v778
          %v811 = vpack.c.b16 %v779, %v779
          %v812 = vpack.c.b16 %v780, %v780
          %v813 = vpack.c.b16 %v781, %v781
          %v814 = vpack.c.b16 %v782, %v782
          %v815 = vpack.c.b16 %v783, %v783
          %v816 = vpack.c.b16 %v784, %v784
          %v817 = vpack.c.b16 %v785, %v785
          %v818 = vpack.c.b16 %v786, %v786
          %v819 = vpack.c.b16 %v787, %v787
          %v820 = vpack.c.b16 %v788, %v788
          %853 = vst [vmem:[#allocation2] sm:$0xf] %v789
          %854 = vst [vmem:[#allocation2 + $0x4] sm:$0xf] %v790
          %855 = vst [vmem:[#allocation2 + $0x8] sm:$0xf] %v791
          %856 = vst [vmem:[#allocation2 + $0xc] sm:$0xf] %v792
          %857 = vst [vmem:[#allocation2 + $0x10] sm:$0xf] %v793
          %858 = vst [vmem:[#allocation2 + $0x14] sm:$0xf] %v794
          %859 = vst [vmem:[#allocation2 + $0x18] sm:$0xf] %v795
          %860 = vst [vmem:[#allocation2 + $0x1c] sm:$0xf] %v796
          %861 = vst [vmem:[#allocation2 + $0x20] sm:$0xf] %v797
          %862 = vst [vmem:[#allocation2 + $0x24] sm:$0xf] %v798
          %863 = vst [vmem:[#allocation2 + $0x28] sm:$0xf] %v799
          %864 = vst [vmem:[#allocation2 + $0x2c] sm:$0xf] %v800
          %865 = vst [vmem:[#allocation2 + $0x30] sm:$0xf] %v801
          %866 = vst [vmem:[#allocation2 + $0x34] sm:$0xf] %v802
          %867 = vst [vmem:[#allocation2 + $0x38] sm:$0xf] %v803
          %868 = vst [vmem:[#allocation2 + $0x3c] sm:$0xf] %v804
          %869 = vst [vmem:[#allocation2 + $0x40] sm:$0xf] %v805
          %870 = vst [vmem:[#allocation2 + $0x44] sm:$0xf] %v806
          %871 = vst [vmem:[#allocation2 + $0x48] sm:$0xf] %v807
          %872 = vst [vmem:[#allocation2 + $0x4c] sm:$0xf] %v808
          %873 = vst [vmem:[#allocation2 + $0x50] sm:$0xf] %v809
          %874 = vst [vmem:[#allocation2 + $0x54] sm:$0xf] %v810
          %875 = vst [vmem:[#allocation2 + $0x58] sm:$0xf] %v811
          %876 = vst [vmem:[#allocation2 + $0x5c] sm:$0xf] %v812
          %877 = vst [vmem:[#allocation2 + $0x60] sm:$0xf] %v813
          %878 = vst [vmem:[#allocation2 + $0x64] sm:$0xf] %v814
          %879 = vst [vmem:[#allocation2 + $0x68] sm:$0xf] %v815
          %880 = vst [vmem:[#allocation2 + $0x6c] sm:$0xf] %v816
          %881 = vst [vmem:[#allocation2 + $0x70] sm:$0xf] %v817
          %882 = vst [vmem:[#allocation2 + $0x74] sm:$0xf] %v818
          %883 = vst [vmem:[#allocation2 + $0x78] sm:$0xf] %v819
          %884 = vst [vmem:[#allocation2 + $0x7c] sm:$0xf] %v820
          %885 = vst [vmem:[#allocation4] sm:$0xff] 0.0
          %886 = vst [vmem:[#allocation4 + $0x8] sm:$0xff] 0.0
        $region72: #{tpu_custom_call.1} parent=47 // pred_fallthru
          _
        %v887 = vld [vmem:[%s314] sm:$0xff]
        %v888 = vld [vmem:[%s314 + $0x8] sm:$0xff]
        %v889 = vld [vmem:[%s314 + $0x10] sm:$0xff]
        %v890 = vld [vmem:[%s314 + $0x18] sm:$0xff]
        %v891 = vld [vmem:[%s314 + $0x20] sm:$0xff]
        %v892 = vld [vmem:[%s314 + $0x28] sm:$0xff]
        %v893 = vld [vmem:[%s314 + $0x30] sm:$0xff]
        %v894 = vld [vmem:[%s314 + $0x38] sm:$0xff]
        %v895 = vld [vmem:[%s314 + $0x40] sm:$0xff]
        %v896 = vld [vmem:[%s314 + $0x48] sm:$0xff]
        %v897 = vld [vmem:[%s314 + $0x50] sm:$0xff]
        %v898 = vld [vmem:[%s314 + $0x58] sm:$0xff]
        %v899 = vld [vmem:[%s314 + $0x60] sm:$0xff]
        %v900 = vld [vmem:[%s314 + $0x68] sm:$0xff]
        %v901 = vld [vmem:[%s314 + $0x70] sm:$0xff]
        %v902 = vld [vmem:[%s314 + $0x78] sm:$0xff]
        %v903 = vld [vmem:[#allocation2] sm:$0xf]
        %v904 = vld [vmem:[#allocation2 + $0x4] sm:$0xf]
        %v905 = vld [vmem:[#allocation2 + $0x8] sm:$0xf]
        %v906 = vld [vmem:[#allocation2 + $0xc] sm:$0xf]
        %v907 = vld [vmem:[#allocation2 + $0x10] sm:$0xf]
        %v908 = vld [vmem:[#allocation2 + $0x14] sm:$0xf]
        %v909 = vld [vmem:[#allocation2 + $0x18] sm:$0xf]
        %v910 = vld [vmem:[#allocation2 + $0x1c] sm:$0xf]
        %v911 = vld [vmem:[#allocation2 + $0x20] sm:$0xf]
        %v912 = vld [vmem:[#allocation2 + $0x24] sm:$0xf]
        %v913 = vld [vmem:[#allocation2 + $0x28] sm:$0xf]
        %v914 = vld [vmem:[#allocation2 + $0x2c] sm:$0xf]
        %v915 = vld [vmem:[#allocation2 + $0x30] sm:$0xf]
        %v916 = vld [vmem:[#allocation2 + $0x34] sm:$0xf]
        %v917 = vld [vmem:[#allocation2 + $0x38] sm:$0xf]
        %v918 = vld [vmem:[#allocation2 + $0x3c] sm:$0xf]
        %v919 = vld [vmem:[#allocation2 + $0x40] sm:$0xf]
        %v920 = vld [vmem:[#allocation2 + $0x44] sm:$0xf]
        %v921 = vld [vmem:[#allocation2 + $0x48] sm:$0xf]
        %v922 = vld [vmem:[#allocation2 + $0x4c] sm:$0xf]
        %v923 = vld [vmem:[#allocation2 + $0x50] sm:$0xf]
        %v924 = vld [vmem:[#allocation2 + $0x54] sm:$0xf]
        %v925 = vld [vmem:[#allocation2 + $0x58] sm:$0xf]
        %v926 = vld [vmem:[#allocation2 + $0x5c] sm:$0xf]
        %v927 = vld [vmem:[#allocation2 + $0x60] sm:$0xf]
        %v928 = vld [vmem:[#allocation2 + $0x64] sm:$0xf]
        %v929 = vld [vmem:[#allocation2 + $0x68] sm:$0xf]
        %v930 = vld [vmem:[#allocation2 + $0x6c] sm:$0xf]
        %v931 = vld [vmem:[#allocation2 + $0x70] sm:$0xf]
        %v932 = vld [vmem:[#allocation2 + $0x74] sm:$0xf]
        %v933 = vld [vmem:[#allocation2 + $0x78] sm:$0xf]
        %v934 = vld [vmem:[#allocation2 + $0x7c] sm:$0xf]
        %v935 = vld [vmem:[%s4] sm:$0x1]
        %v937 = vlaneseq
        %v938 = vshrl.u32 %v937, 7
        %v939 = vsub.s32 0, %v938
        %v940 = vrot.slane %v935, %v939
        %v958 = vunpack.c.l.b16 %v887
        %v959 = vunpack.c.h.b16 %v887
        %v960 = vunpack.c.l.b16 %v888
        %v961 = vunpack.c.h.b16 %v888
        %v962 = vunpack.c.l.b16 %v889
        %v963 = vunpack.c.h.b16 %v889
        %v964 = vunpack.c.l.b16 %v890
        %v965 = vunpack.c.h.b16 %v890
        %v966 = vunpack.c.l.b16 %v891
        %v967 = vunpack.c.h.b16 %v891
        %v968 = vunpack.c.l.b16 %v892
        %v969 = vunpack.c.h.b16 %v892
        %v970 = vunpack.c.l.b16 %v893
        %v971 = vunpack.c.h.b16 %v893
        %v972 = vunpack.c.l.b16 %v894
        %v973 = vunpack.c.h.b16 %v894
        %v974 = vunpack.c.l.b16 %v895
        %v975 = vunpack.c.h.b16 %v895
        %v976 = vunpack.c.l.b16 %v896
        %v977 = vunpack.c.h.b16 %v896
        %v978 = vunpack.c.l.b16 %v897
        %v979 = vunpack.c.h.b16 %v897
        %v980 = vunpack.c.l.b16 %v898
        %v981 = vunpack.c.h.b16 %v898
        %v982 = vunpack.c.l.b16 %v899
        %v983 = vunpack.c.h.b16 %v899
        %v984 = vunpack.c.l.b16 %v900
        %v985 = vunpack.c.h.b16 %v900
        %v986 = vunpack.c.l.b16 %v901
        %v987 = vunpack.c.h.b16 %v901
        %v988 = vunpack.c.l.b16 %v902
        %v989 = vunpack.c.h.b16 %v902
        %v990 = vpack.c.b16 %v960, %v958
        %v991 = vpack.c.b16 %v961, %v959
        %v992 = vpack.c.b16 %v964, %v962
        %v993 = vpack.c.b16 %v965, %v963
        %v994 = vpack.c.b16 %v968, %v966
        %v995 = vpack.c.b16 %v969, %v967
        %v996 = vpack.c.b16 %v972, %v970
        %v997 = vpack.c.b16 %v973, %v971
        %v998 = vpack.c.b16 %v976, %v974
        %v999 = vpack.c.b16 %v977, %v975
        %v1000 = vpack.c.b16 %v980, %v978
        %v1001 = vpack.c.b16 %v981, %v979
        %v1002 = vpack.c.b16 %v984, %v982
        %v1003 = vpack.c.b16 %v985, %v983
        %v1004 = vpack.c.b16 %v988, %v986
        %v1005 = vpack.c.b16 %v989, %v987
        %v1054 = vunpack.c.l.b16 %v903
        %v1055 = vunpack.c.l.b16 %v904
        %v1056 = vunpack.c.l.b16 %v905
        %v1057 = vunpack.c.l.b16 %v906
        %v1058 = vunpack.c.l.b16 %v907
        %v1059 = vunpack.c.l.b16 %v908
        %v1060 = vunpack.c.l.b16 %v909
        %v1061 = vunpack.c.l.b16 %v910
        %v1062 = vunpack.c.l.b16 %v911
        %v1063 = vunpack.c.l.b16 %v912
        %v1064 = vunpack.c.l.b16 %v913
        %v1065 = vunpack.c.l.b16 %v914
        %v1066 = vunpack.c.l.b16 %v915
        %v1067 = vunpack.c.l.b16 %v916
        %v1068 = vunpack.c.l.b16 %v917
        %v1069 = vunpack.c.l.b16 %v918
        %v1070 = vunpack.c.l.b16 %v919
        %v1071 = vunpack.c.l.b16 %v920
        %v1072 = vunpack.c.l.b16 %v921
        %v1073 = vunpack.c.l.b16 %v922
        %v1074 = vunpack.c.l.b16 %v923
        %v1075 = vunpack.c.l.b16 %v924
        %v1076 = vunpack.c.l.b16 %v925
        %v1077 = vunpack.c.l.b16 %v926
        %v1078 = vunpack.c.l.b16 %v927
        %v1079 = vunpack.c.l.b16 %v928
        %v1080 = vunpack.c.l.b16 %v929
        %v1081 = vunpack.c.l.b16 %v930
        %v1082 = vunpack.c.l.b16 %v931
        %v1083 = vunpack.c.l.b16 %v932
        %v1084 = vunpack.c.l.b16 %v933
        %v1085 = vunpack.c.l.b16 %v934
        %v1086 = vpack.c.b16 %v1055, %v1054
        %v1087 = vpack.c.b16 %v1057, %v1056
        %v1088 = vpack.c.b16 %v1059, %v1058
        %v1089 = vpack.c.b16 %v1061, %v1060
        %v1090 = vpack.c.b16 %v1063, %v1062
        %v1091 = vpack.c.b16 %v1065, %v1064
        %v1092 = vpack.c.b16 %v1067, %v1066
        %v1093 = vpack.c.b16 %v1069, %v1068
        %v1094 = vpack.c.b16 %v1071, %v1070
        %v1095 = vpack.c.b16 %v1073, %v1072
        %v1096 = vpack.c.b16 %v1075, %v1074
        %v1097 = vpack.c.b16 %v1077, %v1076
        %v1098 = vpack.c.b16 %v1079, %v1078
        %v1099 = vpack.c.b16 %v1081, %v1080
        %v1100 = vpack.c.b16 %v1083, %v1082
        %v1101 = vpack.c.b16 %v1085, %v1084
        %1118 = vmatprep.subr.bf16.mxu0 0
        %1119 = vmatpush1.bf16.msra.mxu0 %v1093
        %1120 = vmatprep.subr.bf16.mxu0 0
        %1121 = vmatpush1.bf16.msra.mxu0 %v1092
        %1122 = vmatprep.subr.bf16.mxu0 0
        %1123 = vmatpush1.bf16.msra.mxu0 %v1091
        %1124 = vmatprep.subr.bf16.mxu0 0
        %1125 = vmatpush1.bf16.msra.mxu0 %v1090
        %1126 = vmatprep.subr.bf16.mxu0 0
        %1127 = vmatpush1.bf16.msra.mxu0 %v1089
        %1128 = vmatprep.subr.bf16.mxu0 0
        %1129 = vmatpush1.bf16.msra.mxu0 %v1088
        %1130 = vmatprep.subr.bf16.mxu0 0
        %1131 = vmatpush1.bf16.msra.mxu0 %v1087
        %1132 = vmatprep.subr.bf16.mxu0 0
        %1133 = vmatpush1.bf16.msra.mxu0 %v1086
        %1134 = vmatprep.subr.bf16.mxu0 0
        %1135 = vmatpush2.bf16.msra.mxu0 %v1101
        %1136 = vmatprep.subr.bf16.mxu0 0
        %1137 = vmatpush2.bf16.msra.mxu0 %v1100
        %1138 = vmatprep.subr.bf16.mxu0 0
        %1139 = vmatpush2.bf16.msra.mxu0 %v1099
        %1140 = vmatprep.subr.bf16.mxu0 0
        %1141 = vmatpush2.bf16.msra.mxu0 %v1098
        %1142 = vmatprep.subr.bf16.mxu0 0
        %1143 = vmatpush2.bf16.msra.mxu0 %v1097
        %1144 = vmatprep.subr.bf16.mxu0 0
        %1145 = vmatpush2.bf16.msra.mxu0 %v1096
        %1146 = vmatprep.subr.bf16.mxu0 0
        %1147 = vmatpush2.bf16.msra.mxu0 %v1095
        %1148 = vmatprep.subr.bf16.mxu0 0
        %1149 = vmatpush2.bf16.msra.mxu0 %v1094
        %1150 = vmatprep.mubr.bf16.mxu0 %v991
        %1151 = vmatmul.mubr.bf16.gmra.mxu0 %v990
        %v1152 = vpop.f32.mrf.mxu0
        %v1153 = vadd.f32 %v940, %v1152
        %v1154 = vpop.f32.mrf.mxu0
        %v1155 = vpop.f32.mrf.mxu0
        %v1156 = vadd.f32 %v940, %v1155
        %v1157 = vpop.f32.mrf.mxu0
        %1158 = vmatprep.mubr.bf16.mxu0 %v993
        %1159 = vmatmul.mubr.bf16.gmra.mxu0 %v992
        %v1160 = vpop.f32.mrf.mxu0
        %v1161 = vadd.f32 %v940, %v1160
        %v1162 = vpop.f32.mrf.mxu0
        %v1163 = vpop.f32.mrf.mxu0
        %v1164 = vadd.f32 %v940, %v1163
        %v1165 = vpop.f32.mrf.mxu0
        %1166 = vmatprep.mubr.bf16.mxu0 %v995
        %1167 = vmatmul.mubr.bf16.gmra.mxu0 %v994
        %v1168 = vpop.f32.mrf.mxu0
        %v1169 = vadd.f32 %v940, %v1168
        %v1170 = vpop.f32.mrf.mxu0
        %v1171 = vpop.f32.mrf.mxu0
        %v1172 = vadd.f32 %v940, %v1171
        %v1173 = vpop.f32.mrf.mxu0
        %1174 = vmatprep.mubr.bf16.mxu0 %v997
        %1175 = vmatmul.mubr.bf16.gmra.mxu0 %v996
        %v1176 = vpop.f32.mrf.mxu0
        %v1177 = vadd.f32 %v940, %v1176
        %v1178 = vpop.f32.mrf.mxu0
        %v1179 = vpop.f32.mrf.mxu0
        %v1180 = vadd.f32 %v940, %v1179
        %v1181 = vpop.f32.mrf.mxu0
        %1182 = vmatprep.mubr.bf16.mxu0 %v999
        %1183 = vmatmul.mubr.bf16.gmra.mxu0 %v998
        %v1184 = vpop.f32.mrf.mxu0
        %v1185 = vadd.f32 %v940, %v1184
        %v1186 = vpop.f32.mrf.mxu0
        %v1187 = vpop.f32.mrf.mxu0
        %v1188 = vadd.f32 %v940, %v1187
        %v1189 = vpop.f32.mrf.mxu0
        %1190 = vmatprep.mubr.bf16.mxu0 %v1001
        %1191 = vmatmul.mubr.bf16.gmra.mxu0 %v1000
        %v1192 = vpop.f32.mrf.mxu0
        %v1193 = vadd.f32 %v940, %v1192
        %v1194 = vpop.f32.mrf.mxu0
        %v1195 = vpop.f32.mrf.mxu0
        %v1196 = vadd.f32 %v940, %v1195
        %v1197 = vpop.f32.mrf.mxu0
        %1198 = vmatprep.mubr.bf16.mxu0 %v1003
        %1199 = vmatmul.mubr.bf16.gmra.mxu0 %v1002
        %v1200 = vpop.f32.mrf.mxu0
        %v1201 = vadd.f32 %v940, %v1200
        %v1202 = vpop.f32.mrf.mxu0
        %v1203 = vpop.f32.mrf.mxu0
        %v1204 = vadd.f32 %v940, %v1203
        %v1205 = vpop.f32.mrf.mxu0
        %1206 = vmatprep.mubr.bf16.mxu0 %v1005
        %1207 = vmatmul.mubr.bf16.gmra.mxu0 %v1004
        %v1208 = vpop.f32.mrf.mxu0
        %v1209 = vadd.f32 %v940, %v1208
        %v1210 = vpop.f32.mrf.mxu0
        %v1211 = vpop.f32.mrf.mxu0
        %v1212 = vadd.f32 %v940, %v1211
        %v1213 = vpop.f32.mrf.mxu0
        %1214 = vdwg.mxu0
        %v1215 = vmax.f32 %v1153, 0.0
        %v1216 = vmax.f32 %v1156, 0.0
        %v1217 = vmax.f32 %v1161, 0.0
        %v1218 = vmax.f32 %v1164, 0.0
        %v1219 = vmax.f32 %v1169, 0.0
        %v1220 = vmax.f32 %v1172, 0.0
        %v1221 = vmax.f32 %v1177, 0.0
        %v1222 = vmax.f32 %v1180, 0.0
        %v1223 = vmax.f32 %v1185, 0.0
        %v1224 = vmax.f32 %v1188, 0.0
        %v1225 = vmax.f32 %v1193, 0.0
        %v1226 = vmax.f32 %v1196, 0.0
        %v1227 = vmax.f32 %v1201, 0.0
        %v1228 = vmax.f32 %v1204, 0.0
        %v1229 = vmax.f32 %v1209, 0.0
        %v1230 = vmax.f32 %v1212, 0.0
        %s1231 = smul.u32 %s26, 128
        %v1232 = vpack.c.bf16 %v1216, %v1215
        %v1233 = vpack.c.bf16 %v1218, %v1217
        %v1234 = vpack.c.bf16 %v1220, %v1219
        %v1235 = vpack.c.bf16 %v1222, %v1221
        %v1236 = vpack.c.bf16 %v1224, %v1223
        %v1237 = vpack.c.bf16 %v1226, %v1225
        %v1238 = vpack.c.bf16 %v1228, %v1227
        %v1239 = vpack.c.bf16 %v1230, %v1229
        %v1240 = vld [vmem:[#allocation13] sm:$0xf]
        %v1241 = vld [vmem:[#allocation13 + $0x4] sm:$0xf]
        %v1242 = vld [vmem:[#allocation13 + $0x8] sm:$0xf]
        %v1243 = vld [vmem:[#allocation13 + $0xc] sm:$0xf]
        %v1244 = vld [vmem:[#allocation13 + $0x10] sm:$0xf]
        %v1245 = vld [vmem:[#allocation13 + $0x14] sm:$0xf]
        %v1246 = vld [vmem:[#allocation13 + $0x18] sm:$0xf]
        %v1247 = vld [vmem:[#allocation13 + $0x1c] sm:$0xf]
        %v1248 = vld [vmem:[#allocation13 + $0x20] sm:$0xf]
        %v1249 = vld [vmem:[#allocation13 + $0x24] sm:$0xf]
        %v1250 = vld [vmem:[#allocation13 + $0x28] sm:$0xf]
        %v1251 = vld [vmem:[#allocation13 + $0x2c] sm:$0xf]
        %v1252 = vld [vmem:[#allocation13 + $0x30] sm:$0xf]
        %v1253 = vld [vmem:[#allocation13 + $0x34] sm:$0xf]
        %v1254 = vld [vmem:[#allocation13 + $0x38] sm:$0xf]
        %v1255 = vld [vmem:[#allocation13 + $0x3c] sm:$0xf]
        %v1272 = vunpack.c.l.b16 %v1240
        %v1273 = vunpack.c.l.b16 %v1241
        %v1274 = vunpack.c.l.b16 %v1242
        %v1275 = vunpack.c.l.b16 %v1243
        %v1276 = vunpack.c.l.b16 %v1244
        %v1277 = vunpack.c.l.b16 %v1245
        %v1278 = vunpack.c.l.b16 %v1246
        %v1279 = vunpack.c.l.b16 %v1247
        %v1280 = vunpack.c.l.b16 %v1248
        %v1281 = vunpack.c.l.b16 %v1249
        %v1282 = vunpack.c.l.b16 %v1250
        %v1283 = vunpack.c.l.b16 %v1251
        %v1284 = vunpack.c.l.b16 %v1252
        %v1285 = vunpack.c.l.b16 %v1253
        %v1286 = vunpack.c.l.b16 %v1254
        %v1287 = vunpack.c.l.b16 %v1255
        %v1288 = vpack.c.b16 %v1273, %v1272
        %v1289 = vpack.c.b16 %v1275, %v1274
        %v1290 = vpack.c.b16 %v1277, %v1276
        %v1291 = vpack.c.b16 %v1279, %v1278
        %v1292 = vpack.c.b16 %v1281, %v1280
        %v1293 = vpack.c.b16 %v1283, %v1282
        %v1294 = vpack.c.b16 %v1285, %v1284
        %v1295 = vpack.c.b16 %v1287, %v1286
        %1304 = vmatprep.subr.bf16.mxu0 0
        %1305 = vmatpush1.bf16.msra.mxu0 %v1295
        %1306 = vmatprep.subr.bf16.mxu0 0
        %1307 = vmatpush1.bf16.msra.mxu0 %v1294
        %1308 = vmatprep.subr.bf16.mxu0 0
        %1309 = vmatpush1.bf16.msra.mxu0 %v1293
        %1310 = vmatprep.subr.bf16.mxu0 0
        %1311 = vmatpush1.bf16.msra.mxu0 %v1292
        %1312 = vmatprep.subr.bf16.mxu0 0
        %1313 = vmatpush1.bf16.msra.mxu0 %v1291
        %1314 = vmatprep.subr.bf16.mxu0 0
        %1315 = vmatpush1.bf16.msra.mxu0 %v1290
        %1316 = vmatprep.subr.bf16.mxu0 0
        %1317 = vmatpush1.bf16.msra.mxu0 %v1289
        %1318 = vmatprep.subr.bf16.mxu0 0
        %1319 = vmatpush1.bf16.msra.mxu0 %v1288
        %1320 = vmatprep.subr.bf16.mxu0 0
        %1321 = vmatpush2.bf16.msra.mxu0 0
        %1322 = vmatprep.subr.bf16.mxu0 0
        %1323 = vmatpush2.bf16.msra.mxu0 0
        %1324 = vmatprep.subr.bf16.mxu0 0
        %1325 = vmatpush2.bf16.msra.mxu0 0
        %1326 = vmatprep.subr.bf16.mxu0 0
        %1327 = vmatpush2.bf16.msra.mxu0 0
        %1328 = vmatprep.subr.bf16.mxu0 0
        %1329 = vmatpush2.bf16.msra.mxu0 0
        %1330 = vmatprep.subr.bf16.mxu0 0
        %1331 = vmatpush2.bf16.msra.mxu0 0
        %1332 = vmatprep.subr.bf16.mxu0 0
        %1333 = vmatpush2.bf16.msra.mxu0 0
        %1334 = vmatprep.subr.bf16.mxu0 0
        %1335 = vmatpush2.bf16.msra.mxu0 0
        %1336 = vmatprep.mubr.bf16.mxu0 0
        %1337 = vmatmul.mubr.bf16.gmra.mxu0 %v1232
        %v1338 = vpop.f32.mrf.mxu0
        %v1339 = vadd.f32 0.0, %v1338
        %v1340 = vpop.f32.mrf.mxu0
        %v1341 = vpop.f32.mrf.mxu0
        %v1342 = vadd.f32 0.0, %v1341
        %v1343 = vpop.f32.mrf.mxu0
        %1344 = vmatprep.mubr.bf16.mxu0 0
        %1345 = vmatmul.mubr.bf16.gmra.mxu0 %v1233
        %v1346 = vpop.f32.mrf.mxu0
        %v1347 = vadd.f32 0.0, %v1346
        %v1348 = vpop.f32.mrf.mxu0
        %v1349 = vpop.f32.mrf.mxu0
        %v1350 = vadd.f32 0.0, %v1349
        %v1351 = vpop.f32.mrf.mxu0
        %1352 = vmatprep.mubr.bf16.mxu0 0
        %1353 = vmatmul.mubr.bf16.gmra.mxu0 %v1234
        %v1354 = vpop.f32.mrf.mxu0
        %v1355 = vadd.f32 0.0, %v1354
        %v1356 = vpop.f32.mrf.mxu0
        %v1357 = vpop.f32.mrf.mxu0
        %v1358 = vadd.f32 0.0, %v1357
        %v1359 = vpop.f32.mrf.mxu0
        %1360 = vmatprep.mubr.bf16.mxu0 0
        %1361 = vmatmul.mubr.bf16.gmra.mxu0 %v1235
        %v1362 = vpop.f32.mrf.mxu0
        %v1363 = vadd.f32 0.0, %v1362
        %v1364 = vpop.f32.mrf.mxu0
        %v1365 = vpop.f32.mrf.mxu0
        %v1366 = vadd.f32 0.0, %v1365
        %v1367 = vpop.f32.mrf.mxu0
        %1368 = vmatprep.mubr.bf16.mxu0 0
        %1369 = vmatmul.mubr.bf16.gmra.mxu0 %v1236
        %v1370 = vpop.f32.mrf.mxu0
        %v1371 = vadd.f32 0.0, %v1370
        %v1372 = vpop.f32.mrf.mxu0
        %v1373 = vpop.f32.mrf.mxu0
        %v1374 = vadd.f32 0.0, %v1373
        %v1375 = vpop.f32.mrf.mxu0
        %1376 = vmatprep.mubr.bf16.mxu0 0
        %1377 = vmatmul.mubr.bf16.gmra.mxu0 %v1237
        %v1378 = vpop.f32.mrf.mxu0
        %v1379 = vadd.f32 0.0, %v1378
        %v1380 = vpop.f32.mrf.mxu0
        %v1381 = vpop.f32.mrf.mxu0
        %v1382 = vadd.f32 0.0, %v1381
        %v1383 = vpop.f32.mrf.mxu0
        %1384 = vmatprep.mubr.bf16.mxu0 0
        %1385 = vmatmul.mubr.bf16.gmra.mxu0 %v1238
        %v1386 = vpop.f32.mrf.mxu0
        %v1387 = vadd.f32 0.0, %v1386
        %v1388 = vpop.f32.mrf.mxu0
        %v1389 = vpop.f32.mrf.mxu0
        %v1390 = vadd.f32 0.0, %v1389
        %v1391 = vpop.f32.mrf.mxu0
        %1392 = vmatprep.mubr.bf16.mxu0 0
        %1393 = vmatmul.mubr.bf16.gmra.mxu0 %v1239
        %v1394 = vpop.f32.mrf.mxu0
        %v1395 = vadd.f32 0.0, %v1394
        %v1396 = vpop.f32.mrf.mxu0
        %v1397 = vpop.f32.mrf.mxu0
        %v1398 = vadd.f32 0.0, %v1397
        %v1399 = vpop.f32.mrf.mxu0
        %1400 = vdwg.mxu0
        %v1401 = vpack.c.bf16 %v1342, %v1339
        %v1402 = vpack.c.bf16 %v1350, %v1347
        %v1403 = vpack.c.bf16 %v1358, %v1355
        %v1404 = vpack.c.bf16 %v1366, %v1363
        %v1405 = vpack.c.bf16 %v1374, %v1371
        %v1406 = vpack.c.bf16 %v1382, %v1379
        %v1407 = vpack.c.bf16 %v1390, %v1387
        %v1408 = vpack.c.bf16 %v1398, %v1395
        %v1417 = vunpack.c.l.b16 %v1401
        %v1418 = vunpack.c.h.b16 %v1401
        %v1419 = vunpack.c.l.b16 %v1402
        %v1420 = vunpack.c.h.b16 %v1402
        %v1421 = vunpack.c.l.b16 %v1403
        %v1422 = vunpack.c.h.b16 %v1403
        %v1423 = vunpack.c.l.b16 %v1404
        %v1424 = vunpack.c.h.b16 %v1404
        %v1425 = vunpack.c.l.b16 %v1405
        %v1426 = vunpack.c.h.b16 %v1405
        %v1427 = vunpack.c.l.b16 %v1406
        %v1428 = vunpack.c.h.b16 %v1406
        %v1429 = vunpack.c.l.b16 %v1407
        %v1430 = vunpack.c.h.b16 %v1407
        %v1431 = vunpack.c.l.b16 %v1408
        %v1432 = vunpack.c.h.b16 %v1408
        %v1433 = vpack.c.b16 %v1417, %v1417
        %v1434 = vpack.c.b16 %v1418, %v1418
        %v1435 = vpack.c.b16 %v1419, %v1419
        %v1436 = vpack.c.b16 %v1420, %v1420
        %v1437 = vpack.c.b16 %v1421, %v1421
        %v1438 = vpack.c.b16 %v1422, %v1422
        %v1439 = vpack.c.b16 %v1423, %v1423
        %v1440 = vpack.c.b16 %v1424, %v1424
        %v1441 = vpack.c.b16 %v1425, %v1425
        %v1442 = vpack.c.b16 %v1426, %v1426
        %v1443 = vpack.c.b16 %v1427, %v1427
        %v1444 = vpack.c.b16 %v1428, %v1428
        %v1445 = vpack.c.b16 %v1429, %v1429
        %v1446 = vpack.c.b16 %v1430, %v1430
        %v1447 = vpack.c.b16 %v1431, %v1431
        %v1448 = vpack.c.b16 %v1432, %v1432
        %s1465 = sshra.s32 %s1231, 3
        %s1466 = sand.u32 %s1231, 7
        %s1467 = smul.addr %s1465, 4
        %s1468 = scalar_lea.vmem [#allocation3], %s1467
        %1469 = vst [vmem:[%s1468] sm:$0xf] %v1433
        %1470 = vst [vmem:[%s1468 + $0x4] sm:$0xf] %v1434
        %1471 = vst [vmem:[%s1468 + $0x8] sm:$0xf] %v1435
        %1472 = vst [vmem:[%s1468 + $0xc] sm:$0xf] %v1436
        %1473 = vst [vmem:[%s1468 + $0x10] sm:$0xf] %v1437
        %1474 = vst [vmem:[%s1468 + $0x14] sm:$0xf] %v1438
        %1475 = vst [vmem:[%s1468 + $0x18] sm:$0xf] %v1439
        %1476 = vst [vmem:[%s1468 + $0x1c] sm:$0xf] %v1440
        %1477 = vst [vmem:[%s1468 + $0x20] sm:$0xf] %v1441
        %1478 = vst [vmem:[%s1468 + $0x24] sm:$0xf] %v1442
        %1479 = vst [vmem:[%s1468 + $0x28] sm:$0xf] %v1443
        %1480 = vst [vmem:[%s1468 + $0x2c] sm:$0xf] %v1444
        %1481 = vst [vmem:[%s1468 + $0x30] sm:$0xf] %v1445
        %1482 = vst [vmem:[%s1468 + $0x34] sm:$0xf] %v1446
        %1483 = vst [vmem:[%s1468 + $0x38] sm:$0xf] %v1447
        %1484 = vst [vmem:[%s1468 + $0x3c] sm:$0xf] %v1448
        %v1485 = vld [vmem:[#allocation4] sm:$0xff]
        %v1486 = vld [vmem:[#allocation4 + $0x8] sm:$0xff]
        %v1487 = vld [vmem:[%s323] sm:$0xf]
        %1488 = vmatprep.subr.bf16.mxu0 %v1005
        %1489 = vmatpush1.bf16.msra.mxu0 %v1004
        %1490 = vmatprep.subr.bf16.mxu0 %v1003
        %1491 = vmatpush1.bf16.msra.mxu0 %v1002
        %1492 = vmatprep.subr.bf16.mxu0 %v1001
        %1493 = vmatpush1.bf16.msra.mxu0 %v1000
        %1494 = vmatprep.subr.bf16.mxu0 %v999
        %1495 = vmatpush1.bf16.msra.mxu0 %v998
        %1496 = vmatprep.subr.bf16.mxu0 %v997
        %1497 = vmatpush1.bf16.msra.mxu0 %v996
        %1498 = vmatprep.subr.bf16.mxu0 %v995
        %1499 = vmatpush1.bf16.msra.mxu0 %v994
        %1500 = vmatprep.subr.bf16.mxu0 %v993
        %1501 = vmatpush1.bf16.msra.mxu0 %v992
        %1502 = vmatprep.subr.bf16.mxu0 %v991
        %1503 = vmatpush1.bf16.msra.mxu0 %v990
        %1504 = vmatprep.subr.bf16.mxu0 0
        %1505 = vmatpush2.bf16.msra.mxu0 0
        %1506 = vmatprep.subr.bf16.mxu0 0
        %1507 = vmatpush2.bf16.msra.mxu0 0
        %1508 = vmatprep.subr.bf16.mxu0 0
        %1509 = vmatpush2.bf16.msra.mxu0 0
        %1510 = vmatprep.subr.bf16.mxu0 0
        %1511 = vmatpush2.bf16.msra.mxu0 0
        %1512 = vmatprep.subr.bf16.mxu0 0
        %1513 = vmatpush2.bf16.msra.mxu0 0
        %1514 = vmatprep.subr.bf16.mxu0 0
        %1515 = vmatpush2.bf16.msra.mxu0 0
        %1516 = vmatprep.subr.bf16.mxu0 0
        %1517 = vmatpush2.bf16.msra.mxu0 0
        %1518 = vmatprep.subr.bf16.mxu0 0
        %1519 = vmatpush2.bf16.msra.mxu0 0
        %1520 = vmatprep.mubr.bf16.mxu0 0
        %1521 = vmatmul.mubr.bf16.gmra.mxu0 %v1487
        %v1522 = vpop.f32.mrf.mxu0
        %v1523 = vadd.f32 0.0, %v1522
        %v1524 = vpop.f32.mrf.mxu0
        %v1525 = vadd.f32 0.0, %v1524
        %v1526 = vpop.f32.mrf.mxu0
        %v1527 = vpop.f32.mrf.mxu0
        %1528 = vdwg.mxu0
        %v1529 = vadd.f32 %v1485, %v1523
        %v1530 = vadd.f32 %v1486, %v1525
        %1531 = vst [vmem:[#allocation4] sm:$0xff] %v1529
        %1532 = vst [vmem:[#allocation4 + $0x8] sm:$0xff] %v1530
        %p1533 = scmp.eq.s32.totalorder %s26, 1
        // Predicated region
        $region73: #{tpu_custom_call.1} parent=47 // pred_check
          %p1534 = pneg %p1533
        $region74: #{tpu_custom_call.1} parent=47 // pred_check_branch
          %1536 = sbr.rel (%p1534) target = $region76
        $region75: #{tpu_custom_call.1} parent=47 // pred_region
          %v1537 = vld [vmem:[#allocation4] sm:$0xff]
          %v1538 = vld [vmem:[#allocation4 + $0x8] sm:$0xff]
          %v1539 = vpack.c.bf16 %v1537, %v1537
          %v1540 = vpack.c.bf16 %v1538, %v1538
          %v1541 = vld [vmem:[#allocation3] sm:$0xf]
          %v1542 = vld [vmem:[#allocation3 + $0x4] sm:$0xf]
          %v1543 = vld [vmem:[#allocation3 + $0x8] sm:$0xf]
          %v1544 = vld [vmem:[#allocation3 + $0xc] sm:$0xf]
          %v1545 = vld [vmem:[#allocation3 + $0x10] sm:$0xf]
          %v1546 = vld [vmem:[#allocation3 + $0x14] sm:$0xf]
          %v1547 = vld [vmem:[#allocation3 + $0x18] sm:$0xf]
          %v1548 = vld [vmem:[#allocation3 + $0x1c] sm:$0xf]
          %v1549 = vld [vmem:[#allocation3 + $0x20] sm:$0xf]
          %v1550 = vld [vmem:[#allocation3 + $0x24] sm:$0xf]
          %v1551 = vld [vmem:[#allocation3 + $0x28] sm:$0xf]
          %v1552 = vld [vmem:[#allocation3 + $0x2c] sm:$0xf]
          %v1553 = vld [vmem:[#allocation3 + $0x30] sm:$0xf]
          %v1554 = vld [vmem:[#allocation3 + $0x34] sm:$0xf]
          %v1555 = vld [vmem:[#allocation3 + $0x38] sm:$0xf]
          %v1556 = vld [vmem:[#allocation3 + $0x3c] sm:$0xf]
          %v1557 = vld [vmem:[#allocation3 + $0x40] sm:$0xf]
          %v1558 = vld [vmem:[#allocation3 + $0x44] sm:$0xf]
          %v1559 = vld [vmem:[#allocation3 + $0x48] sm:$0xf]
          %v1560 = vld [vmem:[#allocation3 + $0x4c] sm:$0xf]
          %v1561 = vld [vmem:[#allocation3 + $0x50] sm:$0xf]
          %v1562 = vld [vmem:[#allocation3 + $0x54] sm:$0xf]
          %v1563 = vld [vmem:[#allocation3 + $0x58] sm:$0xf]
          %v1564 = vld [vmem:[#allocation3 + $0x5c] sm:$0xf]
          %v1565 = vld [vmem:[#allocation3 + $0x60] sm:$0xf]
          %v1566 = vld [vmem:[#allocation3 + $0x64] sm:$0xf]
          %v1567 = vld [vmem:[#allocation3 + $0x68] sm:$0xf]
          %v1568 = vld [vmem:[#allocation3 + $0x6c] sm:$0xf]
          %v1569 = vld [vmem:[#allocation3 + $0x70] sm:$0xf]
          %v1570 = vld [vmem:[#allocation3 + $0x74] sm:$0xf]
          %v1571 = vld [vmem:[#allocation3 + $0x78] sm:$0xf]
          %v1572 = vld [vmem:[#allocation3 + $0x7c] sm:$0xf]
          %v1573 = vld [vmem:[%s6] sm:$0x1]
          %v1575 = vlaneseq
          %v1576 = vshrl.u32 %v1575, 7
          %v1577 = vsub.s32 0, %v1576
          %v1578 = vrot.slane %v1573, %v1577
          %v1612 = vunpack.c.l.b16 %v1541
          %v1613 = vunpack.c.l.b16 %v1542
          %v1614 = vunpack.c.l.b16 %v1543
          %v1615 = vunpack.c.l.b16 %v1544
          %v1616 = vunpack.c.l.b16 %v1545
          %v1617 = vunpack.c.l.b16 %v1546
          %v1618 = vunpack.c.l.b16 %v1547
          %v1619 = vunpack.c.l.b16 %v1548
          %v1620 = vunpack.c.l.b16 %v1549
          %v1621 = vunpack.c.l.b16 %v1550
          %v1622 = vunpack.c.l.b16 %v1551
          %v1623 = vunpack.c.l.b16 %v1552
          %v1624 = vunpack.c.l.b16 %v1553
          %v1625 = vunpack.c.l.b16 %v1554
          %v1626 = vunpack.c.l.b16 %v1555
          %v1627 = vunpack.c.l.b16 %v1556
          %v1628 = vunpack.c.l.b16 %v1557
          %v1629 = vunpack.c.l.b16 %v1558
          %v1630 = vunpack.c.l.b16 %v1559
          %v1631 = vunpack.c.l.b16 %v1560
          %v1632 = vunpack.c.l.b16 %v1561
          %v1633 = vunpack.c.l.b16 %v1562
          %v1634 = vunpack.c.l.b16 %v1563
          %v1635 = vunpack.c.l.b16 %v1564
          %v1636 = vunpack.c.l.b16 %v1565
          %v1637 = vunpack.c.l.b16 %v1566
          %v1638 = vunpack.c.l.b16 %v1567
          %v1639 = vunpack.c.l.b16 %v1568
          %v1640 = vunpack.c.l.b16 %v1569
          %v1641 = vunpack.c.l.b16 %v1570
          %v1642 = vunpack.c.l.b16 %v1571
          %v1643 = vunpack.c.l.b16 %v1572
          %v1644 = vpack.c.b16 %v1613, %v1612
          %v1645 = vpack.c.b16 %v1615, %v1614
          %v1646 = vpack.c.b16 %v1617, %v1616
          %v1647 = vpack.c.b16 %v1619, %v1618
          %v1648 = vpack.c.b16 %v1621, %v1620
          %v1649 = vpack.c.b16 %v1623, %v1622
          %v1650 = vpack.c.b16 %v1625, %v1624
          %v1651 = vpack.c.b16 %v1627, %v1626
          %v1652 = vpack.c.b16 %v1629, %v1628
          %v1653 = vpack.c.b16 %v1631, %v1630
          %v1654 = vpack.c.b16 %v1633, %v1632
          %v1655 = vpack.c.b16 %v1635, %v1634
          %v1656 = vpack.c.b16 %v1637, %v1636
          %v1657 = vpack.c.b16 %v1639, %v1638
          %v1658 = vpack.c.b16 %v1641, %v1640
          %v1659 = vpack.c.b16 %v1643, %v1642
          %1676 = vmatprep.subr.bf16.mxu0 0
          %1677 = vmatpush1.bf16.msra.mxu0 %v1651
          %1678 = vmatprep.subr.bf16.mxu0 0
          %1679 = vmatpush1.bf16.msra.mxu0 %v1650
          %1680 = vmatprep.subr.bf16.mxu0 0
          %1681 = vmatpush1.bf16.msra.mxu0 %v1649
          %1682 = vmatprep.subr.bf16.mxu0 0
          %1683 = vmatpush1.bf16.msra.mxu0 %v1648
          %1684 = vmatprep.subr.bf16.mxu0 0
          %1685 = vmatpush1.bf16.msra.mxu0 %v1647
          %1686 = vmatprep.subr.bf16.mxu0 0
          %1687 = vmatpush1.bf16.msra.mxu0 %v1646
          %1688 = vmatprep.subr.bf16.mxu0 0
          %1689 = vmatpush1.bf16.msra.mxu0 %v1645
          %1690 = vmatprep.subr.bf16.mxu0 0
          %1691 = vmatpush1.bf16.msra.mxu0 %v1644
          %1692 = vmatprep.subr.bf16.mxu0 0
          %1693 = vmatpush2.bf16.msra.mxu0 %v1659
          %1694 = vmatprep.subr.bf16.mxu0 0
          %1695 = vmatpush2.bf16.msra.mxu0 %v1658
          %1696 = vmatprep.subr.bf16.mxu0 0
          %1697 = vmatpush2.bf16.msra.mxu0 %v1657
          %1698 = vmatprep.subr.bf16.mxu0 0
          %1699 = vmatpush2.bf16.msra.mxu0 %v1656
          %1700 = vmatprep.subr.bf16.mxu0 0
          %1701 = vmatpush2.bf16.msra.mxu0 %v1655
          %1702 = vmatprep.subr.bf16.mxu0 0
          %1703 = vmatpush2.bf16.msra.mxu0 %v1654
          %1704 = vmatprep.subr.bf16.mxu0 0
          %1705 = vmatpush2.bf16.msra.mxu0 %v1653
          %1706 = vmatprep.subr.bf16.mxu0 0
          %1707 = vmatpush2.bf16.msra.mxu0 %v1652
          %1708 = vmatprep.mubr.bf16.mxu0 %v1540
          %1709 = vmatmul.mubr.bf16.gmra.mxu0 %v1539
          %v1710 = vpop.f32.mrf.mxu0
          %v1711 = vadd.f32 %v1578, %v1710
          %v1712 = vpop.f32.mrf.mxu0
          %v1713 = vpop.f32.mrf.mxu0
          %v1714 = vpop.f32.mrf.mxu0
          %1715 = vdwg.mxu0
          %1716 = vst [vmem:[#allocation14] sm:$0xff] %v1711
        $region76: #{tpu_custom_call.1} parent=47 // pred_fallthru
          _
        // Predicated region
        $region77: #{tpu_custom_call.1} parent=47 // pred_check
          %p1717 = pneg %p196
        $region78: #{tpu_custom_call.1} parent=47 // pred_check_branch
          %1719 = sbr.rel (%p1717) target = $region80
        $region79: #{tpu_custom_call.1} parent=47 // pred_region
          %s1721 = ssub.s32 128, 128
          %1722 = vsyncadd [#allocation7], %s1721
          %s1724 = sshll.u32 [#allocation14], 4
          %s1725 = int_to_ptr.vmem [resolvable:$true] %s1724
          %1727 = dma.vmem_to_hbm [thread:$0]  %s1725, 128, %s7, [#allocation7]
        $region80: #{tpu_custom_call.1} parent=47 // pred_fallthru
          _
        // Predicated region
        $region81: #{tpu_custom_call.1} parent=47 // pred_check
          %p1728 = pneg %p196
        $region82: #{tpu_custom_call.1} parent=47 // pred_check_branch
          %1730 = sbr.rel (%p1728) target = $region84
        $region83: #{tpu_custom_call.1} parent=47 // pred_region
          %1731 = dma.done [#allocation7], 128
        $region84: #{tpu_custom_call.1} parent=47 // pred_fallthru
          _
      $region48: #{tpu_custom_call.1} parent=5 // pred_fallthru
        _
      %p1732 = scmp.le.s32.totalorder 2, %s21
      // Predicated region
      $region85: #{tpu_custom_call.1} parent=5 // pred_check
        %p1733 = pneg %p1732
      $region86: #{tpu_custom_call.1} parent=5 // pred_check_branch
        %1735 = sbr.rel (%p1733) target = $region88
      $region87: #{tpu_custom_call.1} parent=5 // pred_region
        %s1736 = ssub.s32 %s21, 2
      $region88: #{tpu_custom_call.1} parent=5 // pred_fallthru
        _
    $region6: #{tpu_custom_call.1} parent=1 // loop_footer
      %s25 = sadd.s32 1, %s21
    $region7: #{tpu_custom_call.1} parent=1 // loop_footer_branch
      %20 = sbr.rel target = $region3
    $region8: #{tpu_custom_call.1} parent=1 // loop_exit
      _
    %1737 = vsyncpa [#allocation6], 1
    %s1738 = scalar_lea.sflag [#allocation6], 1
    %1739 = vsyncpa %s1738, 1
    %1740 = vsyncpa [#allocation9], 1
    %s1741 = scalar_lea.sflag [#allocation9], 1
    %1742 = vsyncpa %s1741, 1
    %1743 = vsyncpa [#allocation12], 1
    %1744 = vsyncpa [#allocation7], 1
    %s1745 = scalar_lea.sflag [#allocation7], 1
    %1746 = vsyncpa %s1745, 1

</llo_original>
